<compile_context>
chip_gen: v5e
topology: v5e:2x2
jax: 0.10.0
libtpu: 0.0.40
codegen_flags: <defaults>
</compile_context>

<pallas_src>
import jax
import jax.numpy as jnp
from jax.experimental import pallas as pl
from jax.experimental.pallas import tpu as pltpu


def _round_up(x, m):
    return (x + m - 1) // m * m


def _largest_divisor_tile(n, cap, unit=128):
    """Largest multiple of `unit` that divides n and is <= cap (n % unit == 0)."""
    k = max(min(cap, n) // unit, 1)
    while k > 1:
        t = k * unit
        if n % t == 0:
            return t
        k -= 1
    return unit


def _ipd_kernel_resident(zi_ref, zT_ref, adj_ref):
    # zi_ref : (tm, D)   row tile of z
    # zT_ref : (D, Np)   all of z transposed, VMEM-resident across the grid
    # adj_ref: (tm, tn)  output tile = sigmoid(zi @ zT[:, j0:j0+tn])
    tn = adj_ref.shape[1]
    j0 = pl.multiple_of(pl.program_id(1) * tn, 128)
    zj = zT_ref[:, pl.ds(j0, tn)]                       # (D, tn), lane-dense
    s = jnp.dot(zi_ref[...], zj, preferred_element_type=jnp.float32)
    # sigmoid(s) == 0.5 * (tanh(0.5*s) + 1): single EUP transcendental / elem
    adj_ref[...] = (0.5 * (jnp.tanh(0.5 * s) + 1.0)).astype(adj_ref.dtype)


def _ipd_kernel_tiled(zi_ref, zjT_ref, adj_ref):
    # Streaming fallback: zjT_ref is a (D, tn) column tile of z.T.
    s = jnp.dot(zi_ref[...], zjT_ref[...], preferred_element_type=jnp.float32)
    adj_ref[...] = (0.5 * (jnp.tanh(0.5 * s) + 1.0)).astype(adj_ref.dtype)


def inner_product_decoder(z, *, tm=None, tn=None, out_dtype=None):
    """adj = sigmoid(z @ z.T) for z: (N, D).  Inference-mode dropout = identity."""
    N, D = z.shape
    in_dtype = jnp.dtype(z.dtype)
    out_dtype = jnp.dtype(out_dtype) if out_dtype is not None else in_dtype

    # Pad the node dimension to a multiple of 128 so all tiles are lane-dense;
    # padded rows/cols are sliced off the returned adjacency.
    Np = _round_up(N, 128)
    if Np != N:
        z = jnp.pad(z, ((0, Np - N), (0, 0)))
    zT = z.T                                            # (D, Np), lane-dense

    in_bytes = in_dtype.itemsize
    out_bytes = out_dtype.itemsize

    # Generation-aware VMEM budget.
    try:
        vmem_cap = int(pltpu.get_tpu_info().vmem_capacity_bytes)
    except Exception:
        vmem_cap = 64 << 20                             # conservative (v7x per-TC)
    big_vmem = vmem_cap >= (100 << 20)                  # v5e / v6e (128 MiB)
    cap = (96 << 20) if big_vmem else (48 << 20)

    # Default tiles: keep tn wide (long contiguous HBM write bursts).
    if tm is None:
        tm = 512 if big_vmem else 256
    if tn is None:
        tn = 2048
    tm = _largest_divisor_tile(Np, min(tm, Np))
    tn = _largest_divisor_tile(Np, min(tn, Np))

    # Lane/sublane-padded VMEM footprints.
    D_lanes = _round_up(D, 128)                         # (tm, D): D pads to 128 lanes
    D_sub = _round_up(D, 8)                             # (D, Np): D pads to 8 sublanes
    resident_bytes = D_sub * Np * in_bytes              # single-buffered zT slab
    resident_ok = resident_bytes <= vmem_cap // 4

    def need(tm_, tn_):
        return (2 * tm_ * D_lanes * in_bytes            # double-buffered zi tile
                + 2 * tm_ * tn_ * out_bytes             # double-buffered output tile
                + tm_ * tn_ * 4                         # realized f32 matmul tile
                + (resident_bytes if resident_ok
                   else 2 * D_sub * tn_ * in_bytes))    # streamed zT tiles

    # Shrink tm first (preserves write width tn), then tn, until we fit.
    while need(tm, tn) + (2 << 20) > cap and (tm > 128 or tn > 128):
        if tm > 128:
            tm = _largest_divisor_tile(Np, tm // 2)
        else:
            tn = _largest_divisor_tile(Np, tn // 2)

    # v7x megacore: avoid a degenerate (1, 1) grid for large N.
    if Np >= 1024 and Np // tm == 1 and Np // tn == 1 and tm > 128:
        tm = _largest_divisor_tile(Np, tm // 2)

    grid = (Np // tm, Np // tn)
    vmem_limit = int(min(max(need(tm, tn) + (4 << 20), 32 << 20), cap))

    zi_spec = pl.BlockSpec((tm, D), lambda i, j: (i, 0))
    out_spec = pl.BlockSpec((tm, tn), lambda i, j: (i, j))
    cost = pl.CostEstimate(
        flops=2 * Np * Np * D,
        transcendentals=Np * Np,
        bytes_accessed=Np * Np * out_bytes + 2 * Np * D * in_bytes,
    )

    def run(kernel, zT_spec, limit):
        return pl.pallas_call(
            kernel,
            out_shape=jax.ShapeDtypeStruct((Np, Np), out_dtype),
            grid_spec=pltpu.PrefetchScalarGridSpec(
                num_scalar_prefetch=0,
                grid=grid,
                in_specs=[zi_spec, zT_spec],
                out_specs=out_spec,
            ),
            compiler_params=pltpu.CompilerParams(
                dimension_semantics=("parallel", "parallel"),
                vmem_limit_bytes=int(limit),
            ),
            cost_estimate=cost,
        )(z, zT)

    out = None
    if resident_ok:
        # Constant-index resident operand: a single buffer suffices.
        attempts = [
            (pl.BlockSpec((D, Np), lambda i, j: (0, 0),
                          pipeline_mode=pl.Buffered(1)), vmem_limit),
            (pl.BlockSpec((D, Np), lambda i, j: (0, 0)),
             min(vmem_limit + resident_bytes, cap)),
        ]
        for spec, limit in attempts:
            try:
                out = run(_ipd_kernel_resident, spec, limit)
                break
            except Exception:
                out = None
    if out is None:
        # Streamed (D, tn) column tiles of z.T; tiny vs the output write traffic.
        zjT_spec = pl.BlockSpec((D, tn), lambda i, j: (0, j))
        tiled_limit = min(
            max(2 * tm * D_lanes * in_bytes + 2 * tm * tn * out_bytes
                + tm * tn * 4 + 2 * D_sub * tn * in_bytes + (4 << 20), 32 << 20),
            cap)
        out = run(_ipd_kernel_tiled, zjT_spec, tiled_limit)

    if Np != N:
        out = out[:N, :N]
    return out


def inner_product_decoder_ref(z):
    return jax.nn.sigmoid(z @ z.T)


if __name__ == "__main__":
    key = jax.random.PRNGKey(0)
    N, D = 256, 32                                      # N nodes, D-dim embeddings
    z = jax.random.normal(key, (N, D), dtype=jnp.float32)

    adj = inner_product_decoder(z)
    adj = jax.block_until_ready(adj)

    ref = inner_product_decoder_ref(z)
    assert adj.shape == (N, N) and adj.dtype == jnp.float32
    assert jnp.allclose(adj, ref, atol=1e-4, rtol=1e-4), "mismatch vs reference"

    print("KERNEL_OK")
</pallas_src>

<mosaic_0001>
module attributes {stable_mosaic.version = 11 : i64} {
  func.func @_ipd_kernel_resident(%arg0: i32, %arg1: i32, %arg2: memref<256x32xf32, #tpu.memory_space<vmem>>, %arg3: memref<32x256xf32, #tpu.memory_space<vmem>>, %arg4: memref<256x256xf32, #tpu.memory_space<vmem>>) attributes {dimension_semantics = [#tpu.dimension_semantics<parallel>, #tpu.dimension_semantics<parallel>], iteration_bounds = array<i64: 1, 1>, scalar_prefetch = 0 : i64, scratch_operands = 0 : i64, tpu.core_type = #tpu.core_type<tc>, window_params = [{transform_indices = @transform_0, window_bounds = array<i64: 256, 32>}, {pipeline_mode = #tpu.pipeline_mode<synchronous>, transform_indices = @transform_1, window_bounds = array<i64: 32, 256>}, {transform_indices = @transform_2, window_bounds = array<i64: 256, 256>}]} {
    %c256_i32 = arith.constant 256 : i32
    %0 = arith.muli %arg1, %c256_i32 : i32
    %1 = tpu.assume_multiple %0, 128 : i32
    %c0 = arith.constant 0 : index
    %2 = arith.index_cast %1 : i32 to index
    %3 = vector.load %arg3[%c0, %2] : memref<32x256xf32, #tpu.memory_space<vmem>>, vector<32x256xf32>
    %c0_0 = arith.constant 0 : index
    %c0_1 = arith.constant 0 : index
    %4 = vector.load %arg2[%c0_0, %c0_1] : memref<256x32xf32, #tpu.memory_space<vmem>>, vector<256x32xf32>
    %cst = arith.constant dense<0.000000e+00> : vector<256x256xf32>
    %5 = tpu.matmul %4, %3, %cst {dimension_numbers = #tpu.dot_dimension_numbers<[1], [0], [0], [1], [0, 0, 1, 1], [], []>} : vector<256x32xf32>, vector<32x256xf32>, vector<256x256xf32> -> vector<256x256xf32>
    %cst_2 = arith.constant 5.000000e-01 : f32
    %6 = vector.broadcast %cst_2 : f32 to vector<256x256xf32>
    %7 = arith.mulf %6, %5 : vector<256x256xf32>
    %8 = math.tanh %7 : vector<256x256xf32>
    %cst_3 = arith.constant 1.000000e+00 : f32
    %9 = vector.broadcast %cst_3 : f32 to vector<256x256xf32>
    %10 = arith.addf %8, %9 : vector<256x256xf32>
    %cst_4 = arith.constant 5.000000e-01 : f32
    %11 = vector.broadcast %cst_4 : f32 to vector<256x256xf32>
    %12 = arith.mulf %11, %10 : vector<256x256xf32>
    %c0_5 = arith.constant 0 : index
    %c0_6 = arith.constant 0 : index
    %13 = vector.load %arg4[%c0_5, %c0_6] : memref<256x256xf32, #tpu.memory_space<vmem>>, vector<256x256xf32>
    tpu.vector_store %arg4[%c0_5, %c0_6], %12 {strides = array<i32>} : memref<256x256xf32, #tpu.memory_space<vmem>>, vector<256x256xf32>,
    return
  }
  func.func @transform_0(%arg0: i32, %arg1: i32) -> (i32, i32) {
    %c0_i32 = arith.constant 0 : i32
    %c0_i32_0 = arith.constant 0 : i32
    return %arg0, %c0_i32 : i32, i32
  }
  func.func @transform_1(%arg0: i32, %arg1: i32) -> (i32, i32) {
    %c0_i32 = arith.constant 0 : i32
    %c0_i32_0 = arith.constant 0 : i32
    %c0_i32_1 = arith.constant 0 : i32
    return %c0_i32, %c0_i32_0 : i32, i32
  }
  func.func @transform_2(%arg0: i32, %arg1: i32) -> (i32, i32) {
    %c0_i32 = arith.constant 0 : i32
    return %arg0, %arg1 : i32, i32
  }
}

module attributes {stable_mosaic.version = 11 : i64} {
  func.func @_ipd_kernel_resident(%arg0: i32, %arg1: i32, %arg2: memref<256x32xf32, #tpu.memory_space<vmem>>, %arg3: memref<32x256xf32, #tpu.memory_space<vmem>>, %arg4: memref<256x256xf32, #tpu.memory_space<vmem>>) attributes {dimension_semantics = [#tpu.dimension_semantics<parallel>, #tpu.dimension_semantics<parallel>], iteration_bounds = array<i64: 1, 1>, scalar_prefetch = 0 : i64, scratch_operands = 0 : i64, tpu.core_type = #tpu.core_type<tc>, window_params = [{transform_indices = @transform_0, window_bounds = array<i64: 256, 32>}, {pipeline_mode = #tpu.pipeline_mode<synchronous>, transform_indices = @transform_1, window_bounds = array<i64: 32, 256>}, {transform_indices = @transform_2, window_bounds = array<i64: 256, 256>}]} {
    %c256_i32 = arith.constant 256 : i32
    %0 = arith.muli %arg1, %c256_i32 : i32
    %1 = tpu.assume_multiple %0, 128 : i32
    %c0 = arith.constant 0 : index
    %2 = arith.index_cast %1 : i32 to index
    %3 = vector.load %arg3[%c0, %2] : memref<32x256xf32, #tpu.memory_space<vmem>>, vector<32x256xf32>
    %c0_0 = arith.constant 0 : index
    %c0_1 = arith.constant 0 : index
    %4 = vector.load %arg2[%c0_0, %c0_1] : memref<256x32xf32, #tpu.memory_space<vmem>>, vector<256x32xf32>
    %cst = arith.constant dense<0.000000e+00> : vector<256x256xf32>
    %5 = tpu.matmul %4, %3, %cst {dimension_numbers = #tpu.dot_dimension_numbers<[1], [0], [0], [1], [0, 0, 1, 1], [], []>} : vector<256x32xf32>, vector<32x256xf32>, vector<256x256xf32> -> vector<256x256xf32>
    %cst_2 = arith.constant 5.000000e-01 : f32
    %6 = vector.broadcast %cst_2 : f32 to vector<256x256xf32>
    %7 = arith.mulf %6, %5 : vector<256x256xf32>
    %8 = math.tanh %7 : vector<256x256xf32>
    %cst_3 = arith.constant 1.000000e+00 : f32
    %9 = vector.broadcast %cst_3 : f32 to vector<256x256xf32>
    %10 = arith.addf %8, %9 : vector<256x256xf32>
    %cst_4 = arith.constant 5.000000e-01 : f32
    %11 = vector.broadcast %cst_4 : f32 to vector<256x256xf32>
    %12 = arith.mulf %11, %10 : vector<256x256xf32>
    %c0_5 = arith.constant 0 : index
    %c0_6 = arith.constant 0 : index
    %13 = vector.load %arg4[%c0_5, %c0_6] : memref<256x256xf32, #tpu.memory_space<vmem>>, vector<256x256xf32>
    tpu.vector_store %arg4[%c0_5, %c0_6], %12 {strides = array<i32>} : memref<256x256xf32, #tpu.memory_space<vmem>>, vector<256x256xf32>,
    return
  }
  func.func @transform_0(%arg0: i32, %arg1: i32) -> (i32, i32) {
    %c0_i32 = arith.constant 0 : i32
    %c0_i32_0 = arith.constant 0 : i32
    return %arg0, %c0_i32 : i32, i32
  }
  func.func @transform_1(%arg0: i32, %arg1: i32) -> (i32, i32) {
    %c0_i32 = arith.constant 0 : i32
    %c0_i32_0 = arith.constant 0 : i32
    %c0_i32_1 = arith.constant 0 : i32
    return %c0_i32, %c0_i32_0 : i32, i32
  }
  func.func @transform_2(%arg0: i32, %arg1: i32) -> (i32, i32) {
    %c0_i32 = arith.constant 0 : i32
    return %arg0, %arg1 : i32, i32
  }
}

module attributes {stable_mosaic.version = 11 : i64} {
  func.func @_ipd_kernel_tiled(%arg0: i32, %arg1: i32, %arg2: memref<256x32xf32, #tpu.memory_space<vmem>>, %arg3: memref<32x256xf32, #tpu.memory_space<vmem>>, %arg4: memref<256x256xf32, #tpu.memory_space<vmem>>) attributes {dimension_semantics = [#tpu.dimension_semantics<parallel>, #tpu.dimension_semantics<parallel>], iteration_bounds = array<i64: 1, 1>, scalar_prefetch = 0 : i64, scratch_operands = 0 : i64, tpu.core_type = #tpu.core_type<tc>, window_params = [{transform_indices = @transform_0, window_bounds = array<i64: 256, 32>}, {transform_indices = @transform_1, window_bounds = array<i64: 32, 256>}, {transform_indices = @transform_2, window_bounds = array<i64: 256, 256>}]} {
    %c0 = arith.constant 0 : index
    %c0_0 = arith.constant 0 : index
    %0 = vector.load %arg2[%c0, %c0_0] : memref<256x32xf32, #tpu.memory_space<vmem>>, vector<256x32xf32>
    %c0_1 = arith.constant 0 : index
    %c0_2 = arith.constant 0 : index
    %1 = vector.load %arg3[%c0_1, %c0_2] : memref<32x256xf32, #tpu.memory_space<vmem>>, vector<32x256xf32>
    %cst = arith.constant dense<0.000000e+00> : vector<256x256xf32>
    %2 = tpu.matmul %0, %1, %cst {dimension_numbers = #tpu.dot_dimension_numbers<[1], [0], [0], [1], [0, 0, 1, 1], [], []>} : vector<256x32xf32>, vector<32x256xf32>, vector<256x256xf32> -> vector<256x256xf32>
    %cst_3 = arith.constant 5.000000e-01 : f32
    %3 = vector.broadcast %cst_3 : f32 to vector<256x256xf32>
    %4 = arith.mulf %3, %2 : vector<256x256xf32>
    %5 = math.tanh %4 : vector<256x256xf32>
    %cst_4 = arith.constant 1.000000e+00 : f32
    %6 = vector.broadcast %cst_4 : f32 to vector<256x256xf32>
    %7 = arith.addf %5, %6 : vector<256x256xf32>
    %cst_5 = arith.constant 5.000000e-01 : f32
    %8 = vector.broadcast %cst_5 : f32 to vector<256x256xf32>
    %9 = arith.mulf %8, %7 : vector<256x256xf32>
    %c0_6 = arith.constant 0 : index
    %c0_7 = arith.constant 0 : index
    %10 = vector.load %arg4[%c0_6, %c0_7] : memref<256x256xf32, #tpu.memory_space<vmem>>, vector<256x256xf32>
    tpu.vector_store %arg4[%c0_6, %c0_7], %9 {strides = array<i32>} : memref<256x256xf32, #tpu.memory_space<vmem>>, vector<256x256xf32>,
    return
  }
  func.func @transform_0(%arg0: i32, %arg1: i32) -> (i32, i32) {
    %c0_i32 = arith.constant 0 : i32
    %c0_i32_0 = arith.constant 0 : i32
    return %arg0, %c0_i32 : i32, i32
  }
  func.func @transform_1(%arg0: i32, %arg1: i32) -> (i32, i32) {
    %c0_i32 = arith.constant 0 : i32
    %c0_i32_0 = arith.constant 0 : i32
    return %c0_i32, %arg1 : i32, i32
  }
  func.func @transform_2(%arg0: i32, %arg1: i32) -> (i32, i32) {
    %c0_i32 = arith.constant 0 : i32
    return %arg0, %arg1 : i32, i32
  }
}

</mosaic_0001>

<llo_original>
// kernel: tpu_custom_call.1
$region0: #{tpu_custom_call.1}
  #allocation0 [shape = 'u32[]', space=smem, size = 0x4, offset = 0x4, fixed_abs, tag = 'smem constant byte address 0x4 - core index']
  #allocation1 [shape = 'u32[72,128]{1,0:T(1,128)}', space=vmem, size = 0x9000, scoped, tag = 'internal scratch']
  %s0 = inlined_call_operand.vmem [shape: f32[256,32], index: 0, kind: input, shape index: {}]
  %s1 = inlined_call_operand.vmem [shape: f32[32,256], index: 1, kind: input, shape index: {}]
  %s2 = inlined_call_operand.hbm [shape: f32[256,256], index: 2, kind: output, shape index: {}]
  %s3 = sld [smem:[#allocation0]]
  $region18: #{tpu_custom_call.1} parent=0
    _
  %s5 = ssub.s32 1, %s3
  %s6 = scalar_select 0, %s5, %s3
  $region1: #{tpu_custom_call.1} parent=0
    #allocation2 [shape = 'u8[262144]{0}', space=vmem, size = 0x40000, scoped, tag = 'output window, operand 0, single buffered']
    #allocation3 [shape = 's32[1]{0}', space=sflag, size = 0x4, scoped, tag = 'scoped memory for tpu_custom_call.1']
    %7 = vsyncpa [#allocation3], 0
    // Predicated region
    $region2: #{tpu_custom_call.1} parent=1 // pred_check
      _
    $region3: #{tpu_custom_call.1} parent=1 // pred_check_branch
      %9 = sbr.rel (0) target = $region5
    $region4: #{tpu_custom_call.1} parent=1 // pred_region
      _
    $region5: #{tpu_custom_call.1} parent=1 // pred_fallthru
      _
    // Predicated region
    $region6: #{tpu_custom_call.1} parent=1 // pred_check
      _
    $region7: #{tpu_custom_call.1} parent=1 // pred_check_branch
      %11 = sbr.rel (0) target = $region9
    $region8: #{tpu_custom_call.1} parent=1 // pred_region
      _
    $region9: #{tpu_custom_call.1} parent=1 // pred_fallthru
      _
    %s12 = smul.u32 0, 256
    %s13 = sshra.s32 %s12, 7
    %s14 = sand.u32 %s12, 127
    %s15 = smul.addr %s13, 8
    %s16 = scalar_lea.vmem %s1, %s15
    %v17 = vld [vmem:[%s16] sm:$0xff]
    %v18 = vld [vmem:[%s16 + $0x8] sm:$0xff]
    %v19 = vld [vmem:[%s16 + $0x10] sm:$0xff]
    %v20 = vld [vmem:[%s16 + $0x18] sm:$0xff]
    %v21 = vld [vmem:[%s16 + $0x20] sm:$0xff]
    %v22 = vld [vmem:[%s16 + $0x28] sm:$0xff]
    %v23 = vld [vmem:[%s16 + $0x30] sm:$0xff]
    %v24 = vld [vmem:[%s16 + $0x38] sm:$0xff]
    %v25 = vld [vmem:[%s0] sm:$0xff]
    %v26 = vld [vmem:[%s0 + $0x8] sm:$0xff]
    %v27 = vld [vmem:[%s0 + $0x10] sm:$0xff]
    %v28 = vld [vmem:[%s0 + $0x18] sm:$0xff]
    %v29 = vld [vmem:[%s0 + $0x20] sm:$0xff]
    %v30 = vld [vmem:[%s0 + $0x28] sm:$0xff]
    %v31 = vld [vmem:[%s0 + $0x30] sm:$0xff]
    %v32 = vld [vmem:[%s0 + $0x38] sm:$0xff]
    %v33 = vld [vmem:[%s0 + $0x40] sm:$0xff]
    %v34 = vld [vmem:[%s0 + $0x48] sm:$0xff]
    %v35 = vld [vmem:[%s0 + $0x50] sm:$0xff]
    %v36 = vld [vmem:[%s0 + $0x58] sm:$0xff]
    %v37 = vld [vmem:[%s0 + $0x60] sm:$0xff]
    %v38 = vld [vmem:[%s0 + $0x68] sm:$0xff]
    %v39 = vld [vmem:[%s0 + $0x70] sm:$0xff]
    %v40 = vld [vmem:[%s0 + $0x78] sm:$0xff]
    %v41 = vld [vmem:[%s0 + $0x80] sm:$0xff]
    %v42 = vld [vmem:[%s0 + $0x88] sm:$0xff]
    %v43 = vld [vmem:[%s0 + $0x90] sm:$0xff]
    %v44 = vld [vmem:[%s0 + $0x98] sm:$0xff]
    %v45 = vld [vmem:[%s0 + $0xa0] sm:$0xff]
    %v46 = vld [vmem:[%s0 + $0xa8] sm:$0xff]
    %v47 = vld [vmem:[%s0 + $0xb0] sm:$0xff]
    %v48 = vld [vmem:[%s0 + $0xb8] sm:$0xff]
    %v49 = vld [vmem:[%s0 + $0xc0] sm:$0xff]
    %v50 = vld [vmem:[%s0 + $0xc8] sm:$0xff]
    %v51 = vld [vmem:[%s0 + $0xd0] sm:$0xff]
    %v52 = vld [vmem:[%s0 + $0xd8] sm:$0xff]
    %v53 = vld [vmem:[%s0 + $0xe0] sm:$0xff]
    %v54 = vld [vmem:[%s0 + $0xe8] sm:$0xff]
    %v55 = vld [vmem:[%s0 + $0xf0] sm:$0xff]
    %v56 = vld [vmem:[%s0 + $0xf8] sm:$0xff]
    %vm57 = vcmask 261120
    %v59 = vsel %vm57, %v25, 0
    %v62 = vsel %vm57, %v26, 0
    %v65 = vsel %vm57, %v27, 0
    %v68 = vsel %vm57, %v28, 0
    %v71 = vsel %vm57, %v29, 0
    %v74 = vsel %vm57, %v30, 0
    %v77 = vsel %vm57, %v31, 0
    %v80 = vsel %vm57, %v32, 0
    %v83 = vsel %vm57, %v33, 0
    %v86 = vsel %vm57, %v34, 0
    %v89 = vsel %vm57, %v35, 0
    %v92 = vsel %vm57, %v36, 0
    %v95 = vsel %vm57, %v37, 0
    %v98 = vsel %vm57, %v38, 0
    %v101 = vsel %vm57, %v39, 0
    %v104 = vsel %vm57, %v40, 0
    %v107 = vsel %vm57, %v41, 0
    %v110 = vsel %vm57, %v42, 0
    %v113 = vsel %vm57, %v43, 0
    %v116 = vsel %vm57, %v44, 0
    %v119 = vsel %vm57, %v45, 0
    %v122 = vsel %vm57, %v46, 0
    %v125 = vsel %vm57, %v47, 0
    %v128 = vsel %vm57, %v48, 0
    %v131 = vsel %vm57, %v49, 0
    %v134 = vsel %vm57, %v50, 0
    %v137 = vsel %vm57, %v51, 0
    %v140 = vsel %vm57, %v52, 0
    %v143 = vsel %vm57, %v53, 0
    %v146 = vsel %vm57, %v54, 0
    %v149 = vsel %vm57, %v55, 0
    %v152 = vsel %vm57, %v56, 0
    %154 = vmatpush.msra.mxu0 0.0
    %155 = vmatpush.msra.mxu0 0.0
    %156 = vmatpush.msra.mxu0 0.0
    %157 = vmatpush.msra.mxu0 0.0
    %158 = vmatpush.msra.mxu0 0.0
    %159 = vmatpush.msra.mxu0 0.0
    %160 = vmatpush.msra.mxu0 0.0
    %161 = vmatpush.msra.mxu0 0.0
    %162 = vmatpush.msra.mxu0 0.0
    %163 = vmatpush.msra.mxu0 0.0
    %164 = vmatpush.msra.mxu0 0.0
    %165 = vmatpush.msra.mxu0 0.0
    %166 = vmatpush.msra.mxu0 %v23
    %167 = vmatpush.msra.mxu0 %v21
    %168 = vmatpush.msra.mxu0 %v19
    %169 = vmatpush.msra.mxu0 %v17
    %170 = vmatmul.f32.gmra.mxu0 %v59
    %v171 = vpop.f32.mrf.mxu0
    %v172 = vadd.f32 0.0, %v171
    %173 = vmatmul.f32.gmra.mxu0 %v62
    %v174 = vpop.f32.mrf.mxu0
    %v175 = vadd.f32 0.0, %v174
    %176 = vmatmul.f32.gmra.mxu0 %v65
    %v177 = vpop.f32.mrf.mxu0
    %v178 = vadd.f32 0.0, %v177
    %179 = vmatmul.f32.gmra.mxu0 %v68
    %v180 = vpop.f32.mrf.mxu0
    %v181 = vadd.f32 0.0, %v180
    %182 = vmatmul.f32.gmra.mxu0 %v71
    %v183 = vpop.f32.mrf.mxu0
    %v184 = vadd.f32 0.0, %v183
    %185 = vmatmul.f32.gmra.mxu0 %v74
    %v186 = vpop.f32.mrf.mxu0
    %v187 = vadd.f32 0.0, %v186
    %188 = vmatmul.f32.gmra.mxu0 %v77
    %v189 = vpop.f32.mrf.mxu0
    %v190 = vadd.f32 0.0, %v189
    %191 = vmatmul.f32.gmra.mxu0 %v80
    %v192 = vpop.f32.mrf.mxu0
    %v193 = vadd.f32 0.0, %v192
    %194 = vmatmul.f32.gmra.mxu0 %v83
    %v195 = vpop.f32.mrf.mxu0
    %v196 = vadd.f32 0.0, %v195
    %197 = vmatmul.f32.gmra.mxu0 %v86
    %v198 = vpop.f32.mrf.mxu0
    %v199 = vadd.f32 0.0, %v198
    %200 = vmatmul.f32.gmra.mxu0 %v89
    %v201 = vpop.f32.mrf.mxu0
    %v202 = vadd.f32 0.0, %v201
    %203 = vmatmul.f32.gmra.mxu0 %v92
    %v204 = vpop.f32.mrf.mxu0
    %v205 = vadd.f32 0.0, %v204
    %206 = vmatmul.f32.gmra.mxu0 %v95
    %v207 = vpop.f32.mrf.mxu0
    %v208 = vadd.f32 0.0, %v207
    %209 = vmatmul.f32.gmra.mxu0 %v98
    %v210 = vpop.f32.mrf.mxu0
    %v211 = vadd.f32 0.0, %v210
    %212 = vmatmul.f32.gmra.mxu0 %v101
    %v213 = vpop.f32.mrf.mxu0
    %v214 = vadd.f32 0.0, %v213
    %215 = vmatmul.f32.gmra.mxu0 %v104
    %v216 = vpop.f32.mrf.mxu0
    %v217 = vadd.f32 0.0, %v216
    %218 = vmatmul.f32.gmra.mxu0 %v107
    %v219 = vpop.f32.mrf.mxu0
    %v220 = vadd.f32 0.0, %v219
    %221 = vmatmul.f32.gmra.mxu0 %v110
    %v222 = vpop.f32.mrf.mxu0
    %v223 = vadd.f32 0.0, %v222
    %224 = vmatmul.f32.gmra.mxu0 %v113
    %v225 = vpop.f32.mrf.mxu0
    %v226 = vadd.f32 0.0, %v225
    %227 = vmatmul.f32.gmra.mxu0 %v116
    %v228 = vpop.f32.mrf.mxu0
    %v229 = vadd.f32 0.0, %v228
    %230 = vmatmul.f32.gmra.mxu0 %v119
    %v231 = vpop.f32.mrf.mxu0
    %v232 = vadd.f32 0.0, %v231
    %233 = vmatmul.f32.gmra.mxu0 %v122
    %v234 = vpop.f32.mrf.mxu0
    %v235 = vadd.f32 0.0, %v234
    %236 = vmatmul.f32.gmra.mxu0 %v125
    %v237 = vpop.f32.mrf.mxu0
    %v238 = vadd.f32 0.0, %v237
    %239 = vmatmul.f32.gmra.mxu0 %v128
    %v240 = vpop.f32.mrf.mxu0
    %v241 = vadd.f32 0.0, %v240
    %242 = vmatmul.f32.gmra.mxu0 %v131
    %v243 = vpop.f32.mrf.mxu0
    %v244 = vadd.f32 0.0, %v243
    %245 = vmatmul.f32.gmra.mxu0 %v134
    %v246 = vpop.f32.mrf.mxu0
    %v247 = vadd.f32 0.0, %v246
    %248 = vmatmul.f32.gmra.mxu0 %v137
    %v249 = vpop.f32.mrf.mxu0
    %v250 = vadd.f32 0.0, %v249
    %251 = vmatmul.f32.gmra.mxu0 %v140
    %v252 = vpop.f32.mrf.mxu0
    %v253 = vadd.f32 0.0, %v252
    %254 = vmatmul.f32.gmra.mxu0 %v143
    %v255 = vpop.f32.mrf.mxu0
    %v256 = vadd.f32 0.0, %v255
    %257 = vmatmul.f32.gmra.mxu0 %v146
    %v258 = vpop.f32.mrf.mxu0
    %v259 = vadd.f32 0.0, %v258
    %260 = vmatmul.f32.gmra.mxu0 %v149
    %v261 = vpop.f32.mrf.mxu0
    %v262 = vadd.f32 0.0, %v261
    %263 = vmatmul.f32.gmra.mxu0 %v152
    %v264 = vpop.f32.mrf.mxu0
    %v265 = vadd.f32 0.0, %v264
    %266 = vdwg.mxu0
    %267 = vmatpush.msra.mxu0 0.0
    %268 = vmatpush.msra.mxu0 0.0
    %269 = vmatpush.msra.mxu0 0.0
    %270 = vmatpush.msra.mxu0 0.0
    %271 = vmatpush.msra.mxu0 0.0
    %272 = vmatpush.msra.mxu0 0.0
    %273 = vmatpush.msra.mxu0 0.0
    %274 = vmatpush.msra.mxu0 0.0
    %275 = vmatpush.msra.mxu0 0.0
    %276 = vmatpush.msra.mxu0 0.0
    %277 = vmatpush.msra.mxu0 0.0
    %278 = vmatpush.msra.mxu0 0.0
    %279 = vmatpush.msra.mxu0 %v24
    %280 = vmatpush.msra.mxu0 %v22
    %281 = vmatpush.msra.mxu0 %v20
    %282 = vmatpush.msra.mxu0 %v18
    %283 = vmatmul.f32.gmra.mxu0 %v59
    %v284 = vpop.f32.mrf.mxu0
    %v285 = vadd.f32 0.0, %v284
    %286 = vmatmul.f32.gmra.mxu0 %v62
    %v287 = vpop.f32.mrf.mxu0
    %v288 = vadd.f32 0.0, %v287
    %289 = vmatmul.f32.gmra.mxu0 %v65
    %v290 = vpop.f32.mrf.mxu0
    %v291 = vadd.f32 0.0, %v290
    %292 = vmatmul.f32.gmra.mxu0 %v68
    %v293 = vpop.f32.mrf.mxu0
    %v294 = vadd.f32 0.0, %v293
    %295 = vmatmul.f32.gmra.mxu0 %v71
    %v296 = vpop.f32.mrf.mxu0
    %v297 = vadd.f32 0.0, %v296
    %298 = vmatmul.f32.gmra.mxu0 %v74
    %v299 = vpop.f32.mrf.mxu0
    %v300 = vadd.f32 0.0, %v299
    %301 = vmatmul.f32.gmra.mxu0 %v77
    %v302 = vpop.f32.mrf.mxu0
    %v303 = vadd.f32 0.0, %v302
    %304 = vmatmul.f32.gmra.mxu0 %v80
    %v305 = vpop.f32.mrf.mxu0
    %v306 = vadd.f32 0.0, %v305
    %307 = vmatmul.f32.gmra.mxu0 %v83
    %v308 = vpop.f32.mrf.mxu0
    %v309 = vadd.f32 0.0, %v308
    %310 = vmatmul.f32.gmra.mxu0 %v86
    %v311 = vpop.f32.mrf.mxu0
    %v312 = vadd.f32 0.0, %v311
    %313 = vmatmul.f32.gmra.mxu0 %v89
    %v314 = vpop.f32.mrf.mxu0
    %v315 = vadd.f32 0.0, %v314
    %316 = vmatmul.f32.gmra.mxu0 %v92
    %v317 = vpop.f32.mrf.mxu0
    %v318 = vadd.f32 0.0, %v317
    %319 = vmatmul.f32.gmra.mxu0 %v95
    %v320 = vpop.f32.mrf.mxu0
    %v321 = vadd.f32 0.0, %v320
    %322 = vmatmul.f32.gmra.mxu0 %v98
    %v323 = vpop.f32.mrf.mxu0
    %v324 = vadd.f32 0.0, %v323
    %325 = vmatmul.f32.gmra.mxu0 %v101
    %v326 = vpop.f32.mrf.mxu0
    %v327 = vadd.f32 0.0, %v326
    %328 = vmatmul.f32.gmra.mxu0 %v104
    %v329 = vpop.f32.mrf.mxu0
    %v330 = vadd.f32 0.0, %v329
    %331 = vmatmul.f32.gmra.mxu0 %v107
    %v332 = vpop.f32.mrf.mxu0
    %v333 = vadd.f32 0.0, %v332
    %334 = vmatmul.f32.gmra.mxu0 %v110
    %v335 = vpop.f32.mrf.mxu0
    %v336 = vadd.f32 0.0, %v335
    %337 = vmatmul.f32.gmra.mxu0 %v113
    %v338 = vpop.f32.mrf.mxu0
    %v339 = vadd.f32 0.0, %v338
    %340 = vmatmul.f32.gmra.mxu0 %v116
    %v341 = vpop.f32.mrf.mxu0
    %v342 = vadd.f32 0.0, %v341
    %343 = vmatmul.f32.gmra.mxu0 %v119
    %v344 = vpop.f32.mrf.mxu0
    %v345 = vadd.f32 0.0, %v344
    %346 = vmatmul.f32.gmra.mxu0 %v122
    %v347 = vpop.f32.mrf.mxu0
    %v348 = vadd.f32 0.0, %v347
    %349 = vmatmul.f32.gmra.mxu0 %v125
    %v350 = vpop.f32.mrf.mxu0
    %v351 = vadd.f32 0.0, %v350
    %352 = vmatmul.f32.gmra.mxu0 %v128
    %v353 = vpop.f32.mrf.mxu0
    %v354 = vadd.f32 0.0, %v353
    %355 = vmatmul.f32.gmra.mxu0 %v131
    %v356 = vpop.f32.mrf.mxu0
    %v357 = vadd.f32 0.0, %v356
    %358 = vmatmul.f32.gmra.mxu0 %v134
    %v359 = vpop.f32.mrf.mxu0
    %v360 = vadd.f32 0.0, %v359
    %361 = vmatmul.f32.gmra.mxu0 %v137
    %v362 = vpop.f32.mrf.mxu0
    %v363 = vadd.f32 0.0, %v362
    %364 = vmatmul.f32.gmra.mxu0 %v140
    %v365 = vpop.f32.mrf.mxu0
    %v366 = vadd.f32 0.0, %v365
    %367 = vmatmul.f32.gmra.mxu0 %v143
    %v368 = vpop.f32.mrf.mxu0
    %v369 = vadd.f32 0.0, %v368
    %370 = vmatmul.f32.gmra.mxu0 %v146
    %v371 = vpop.f32.mrf.mxu0
    %v372 = vadd.f32 0.0, %v371
    %373 = vmatmul.f32.gmra.mxu0 %v149
    %v374 = vpop.f32.mrf.mxu0
    %v375 = vadd.f32 0.0, %v374
    %376 = vmatmul.f32.gmra.mxu0 %v152
    %v377 = vpop.f32.mrf.mxu0
    %v378 = vadd.f32 0.0, %v377
    %379 = vdwg.mxu0
    %v380 = vmul.f32 %v172, 0.5
    %v381 = vmul.f32 %v285, 0.5
    %v382 = vmul.f32 %v175, 0.5
    %v383 = vmul.f32 %v288, 0.5
    %v384 = vmul.f32 %v178, 0.5
    %v385 = vmul.f32 %v291, 0.5
    %v386 = vmul.f32 %v181, 0.5
    %v387 = vmul.f32 %v294, 0.5
    %v388 = vmul.f32 %v184, 0.5
    %v389 = vmul.f32 %v297, 0.5
    %v390 = vmul.f32 %v187, 0.5
    %v391 = vmul.f32 %v300, 0.5
    %v392 = vmul.f32 %v190, 0.5
    %v393 = vmul.f32 %v303, 0.5
    %v394 = vmul.f32 %v193, 0.5
    %v395 = vmul.f32 %v306, 0.5
    %v396 = vmul.f32 %v196, 0.5
    %v397 = vmul.f32 %v309, 0.5
    %v398 = vmul.f32 %v199, 0.5
    %v399 = vmul.f32 %v312, 0.5
    %v400 = vmul.f32 %v202, 0.5
    %v401 = vmul.f32 %v315, 0.5
    %v402 = vmul.f32 %v205, 0.5
    %v403 = vmul.f32 %v318, 0.5
    %v404 = vmul.f32 %v208, 0.5
    %v405 = vmul.f32 %v321, 0.5
    %v406 = vmul.f32 %v211, 0.5
    %v407 = vmul.f32 %v324, 0.5
    %v408 = vmul.f32 %v214, 0.5
    %v409 = vmul.f32 %v327, 0.5
    %v410 = vmul.f32 %v217, 0.5
    %v411 = vmul.f32 %v330, 0.5
    %v412 = vmul.f32 %v220, 0.5
    %v413 = vmul.f32 %v333, 0.5
    %v414 = vmul.f32 %v223, 0.5
    %v415 = vmul.f32 %v336, 0.5
    %v416 = vmul.f32 %v226, 0.5
    %v417 = vmul.f32 %v339, 0.5
    %v418 = vmul.f32 %v229, 0.5
    %v419 = vmul.f32 %v342, 0.5
    %v420 = vmul.f32 %v232, 0.5
    %v421 = vmul.f32 %v345, 0.5
    %v422 = vmul.f32 %v235, 0.5
    %v423 = vmul.f32 %v348, 0.5
    %v424 = vmul.f32 %v238, 0.5
    %v425 = vmul.f32 %v351, 0.5
    %v426 = vmul.f32 %v241, 0.5
    %v427 = vmul.f32 %v354, 0.5
    %v428 = vmul.f32 %v244, 0.5
    %v429 = vmul.f32 %v357, 0.5
    %v430 = vmul.f32 %v247, 0.5
    %v431 = vmul.f32 %v360, 0.5
    %v432 = vmul.f32 %v250, 0.5
    %v433 = vmul.f32 %v363, 0.5
    %v434 = vmul.f32 %v253, 0.5
    %v435 = vmul.f32 %v366, 0.5
    %v436 = vmul.f32 %v256, 0.5
    %v437 = vmul.f32 %v369, 0.5
    %v438 = vmul.f32 %v259, 0.5
    %v439 = vmul.f32 %v372, 0.5
    %v440 = vmul.f32 %v262, 0.5
    %v441 = vmul.f32 %v375, 0.5
    %v442 = vmul.f32 %v265, 0.5
    %v443 = vmul.f32 %v378, 0.5
    %v444 = vtanh.pop %v380
    %v445 = vtanh.pop %v381
    %v446 = vtanh.pop %v382
    %v447 = vtanh.pop %v383
    %v448 = vtanh.pop %v384
    %v449 = vtanh.pop %v385
    %v450 = vtanh.pop %v386
    %v451 = vtanh.pop %v387
    %v452 = vtanh.pop %v388
    %v453 = vtanh.pop %v389
    %v454 = vtanh.pop %v390
    %v455 = vtanh.pop %v391
    %v456 = vtanh.pop %v392
    %v457 = vtanh.pop %v393
    %v458 = vtanh.pop %v394
    %v459 = vtanh.pop %v395
    %v460 = vtanh.pop %v396
    %v461 = vtanh.pop %v397
    %v462 = vtanh.pop %v398
    %v463 = vtanh.pop %v399
    %v464 = vtanh.pop %v400
    %v465 = vtanh.pop %v401
    %v466 = vtanh.pop %v402
    %v467 = vtanh.pop %v403
    %v468 = vtanh.pop %v404
    %v469 = vtanh.pop %v405
    %v470 = vtanh.pop %v406
    %v471 = vtanh.pop %v407
    %v472 = vtanh.pop %v408
    %v473 = vtanh.pop %v409
    %v474 = vtanh.pop %v410
    %v475 = vtanh.pop %v411
    %v476 = vtanh.pop %v412
    %v477 = vtanh.pop %v413
    %v478 = vtanh.pop %v414
    %v479 = vtanh.pop %v415
    %v480 = vtanh.pop %v416
    %v481 = vtanh.pop %v417
    %v482 = vtanh.pop %v418
    %v483 = vtanh.pop %v419
    %v484 = vtanh.pop %v420
    %v485 = vtanh.pop %v421
    %v486 = vtanh.pop %v422
    %v487 = vtanh.pop %v423
    %v488 = vtanh.pop %v424
    %v489 = vtanh.pop %v425
    %v490 = vtanh.pop %v426
    %v491 = vtanh.pop %v427
    %v492 = vtanh.pop %v428
    %v493 = vtanh.pop %v429
    %v494 = vtanh.pop %v430
    %v495 = vtanh.pop %v431
    %v496 = vtanh.pop %v432
    %v497 = vtanh.pop %v433
    %v498 = vtanh.pop %v434
    %v499 = vtanh.pop %v435
    %v500 = vtanh.pop %v436
    %v501 = vtanh.pop %v437
    %v502 = vtanh.pop %v438
    %v503 = vtanh.pop %v439
    %v504 = vtanh.pop %v440
    %v505 = vtanh.pop %v441
    %v506 = vtanh.pop %v442
    %v507 = vtanh.pop %v443
    %v508 = vadd.f32 %v444, 1.0
    %v509 = vadd.f32 %v445, 1.0
    %v510 = vadd.f32 %v446, 1.0
    %v511 = vadd.f32 %v447, 1.0
    %v512 = vadd.f32 %v448, 1.0
    %v513 = vadd.f32 %v449, 1.0
    %v514 = vadd.f32 %v450, 1.0
    %v515 = vadd.f32 %v451, 1.0
    %v516 = vadd.f32 %v452, 1.0
    %v517 = vadd.f32 %v453, 1.0
    %v518 = vadd.f32 %v454, 1.0
    %v519 = vadd.f32 %v455, 1.0
    %v520 = vadd.f32 %v456, 1.0
    %v521 = vadd.f32 %v457, 1.0
    %v522 = vadd.f32 %v458, 1.0
    %v523 = vadd.f32 %v459, 1.0
    %v524 = vadd.f32 %v460, 1.0
    %v525 = vadd.f32 %v461, 1.0
    %v526 = vadd.f32 %v462, 1.0
    %v527 = vadd.f32 %v463, 1.0
    %v528 = vadd.f32 %v464, 1.0
    %v529 = vadd.f32 %v465, 1.0
    %v530 = vadd.f32 %v466, 1.0
    %v531 = vadd.f32 %v467, 1.0
    %v532 = vadd.f32 %v468, 1.0
    %v533 = vadd.f32 %v469, 1.0
    %v534 = vadd.f32 %v470, 1.0
    %v535 = vadd.f32 %v471, 1.0
    %v536 = vadd.f32 %v472, 1.0
    %v537 = vadd.f32 %v473, 1.0
    %v538 = vadd.f32 %v474, 1.0
    %v539 = vadd.f32 %v475, 1.0
    %v540 = vadd.f32 %v476, 1.0
    %v541 = vadd.f32 %v477, 1.0
    %v542 = vadd.f32 %v478, 1.0
    %v543 = vadd.f32 %v479, 1.0
    %v544 = vadd.f32 %v480, 1.0
    %v545 = vadd.f32 %v481, 1.0
    %v546 = vadd.f32 %v482, 1.0
    %v547 = vadd.f32 %v483, 1.0
    %v548 = vadd.f32 %v484, 1.0
    %v549 = vadd.f32 %v485, 1.0
    %v550 = vadd.f32 %v486, 1.0
    %v551 = vadd.f32 %v487, 1.0
    %v552 = vadd.f32 %v488, 1.0
    %v553 = vadd.f32 %v489, 1.0
    %v554 = vadd.f32 %v490, 1.0
    %v555 = vadd.f32 %v491, 1.0
    %v556 = vadd.f32 %v492, 1.0
    %v557 = vadd.f32 %v493, 1.0
    %v558 = vadd.f32 %v494, 1.0
    %v559 = vadd.f32 %v495, 1.0
    %v560 = vadd.f32 %v496, 1.0
    %v561 = vadd.f32 %v497, 1.0
    %v562 = vadd.f32 %v498, 1.0
    %v563 = vadd.f32 %v499, 1.0
    %v564 = vadd.f32 %v500, 1.0
    %v565 = vadd.f32 %v501, 1.0
    %v566 = vadd.f32 %v502, 1.0
    %v567 = vadd.f32 %v503, 1.0
    %v568 = vadd.f32 %v504, 1.0
    %v569 = vadd.f32 %v505, 1.0
    %v570 = vadd.f32 %v506, 1.0
    %v571 = vadd.f32 %v507, 1.0
    %v572 = vmul.f32 %v508, 0.5
    %v573 = vmul.f32 %v509, 0.5
    %v574 = vmul.f32 %v510, 0.5
    %v575 = vmul.f32 %v511, 0.5
    %v576 = vmul.f32 %v512, 0.5
    %v577 = vmul.f32 %v513, 0.5
    %v578 = vmul.f32 %v514, 0.5
    %v579 = vmul.f32 %v515, 0.5
    %v580 = vmul.f32 %v516, 0.5
    %v581 = vmul.f32 %v517, 0.5
    %v582 = vmul.f32 %v518, 0.5
    %v583 = vmul.f32 %v519, 0.5
    %v584 = vmul.f32 %v520, 0.5
    %v585 = vmul.f32 %v521, 0.5
    %v586 = vmul.f32 %v522, 0.5
    %v587 = vmul.f32 %v523, 0.5
    %v588 = vmul.f32 %v524, 0.5
    %v589 = vmul.f32 %v525, 0.5
    %v590 = vmul.f32 %v526, 0.5
    %v591 = vmul.f32 %v527, 0.5
    %v592 = vmul.f32 %v528, 0.5
    %v593 = vmul.f32 %v529, 0.5
    %v594 = vmul.f32 %v530, 0.5
    %v595 = vmul.f32 %v531, 0.5
    %v596 = vmul.f32 %v532, 0.5
    %v597 = vmul.f32 %v533, 0.5
    %v598 = vmul.f32 %v534, 0.5
    %v599 = vmul.f32 %v535, 0.5
    %v600 = vmul.f32 %v536, 0.5
    %v601 = vmul.f32 %v537, 0.5
    %v602 = vmul.f32 %v538, 0.5
    %v603 = vmul.f32 %v539, 0.5
    %v604 = vmul.f32 %v540, 0.5
    %v605 = vmul.f32 %v541, 0.5
    %v606 = vmul.f32 %v542, 0.5
    %v607 = vmul.f32 %v543, 0.5
    %v608 = vmul.f32 %v544, 0.5
    %v609 = vmul.f32 %v545, 0.5
    %v610 = vmul.f32 %v546, 0.5
    %v611 = vmul.f32 %v547, 0.5
    %v612 = vmul.f32 %v548, 0.5
    %v613 = vmul.f32 %v549, 0.5
    %v614 = vmul.f32 %v550, 0.5
    %v615 = vmul.f32 %v551, 0.5
    %v616 = vmul.f32 %v552, 0.5
    %v617 = vmul.f32 %v553, 0.5
    %v618 = vmul.f32 %v554, 0.5
    %v619 = vmul.f32 %v555, 0.5
    %v620 = vmul.f32 %v556, 0.5
    %v621 = vmul.f32 %v557, 0.5
    %v622 = vmul.f32 %v558, 0.5
    %v623 = vmul.f32 %v559, 0.5
    %v624 = vmul.f32 %v560, 0.5
    %v625 = vmul.f32 %v561, 0.5
    %v626 = vmul.f32 %v562, 0.5
    %v627 = vmul.f32 %v563, 0.5
    %v628 = vmul.f32 %v564, 0.5
    %v629 = vmul.f32 %v565, 0.5
    %v630 = vmul.f32 %v566, 0.5
    %v631 = vmul.f32 %v567, 0.5
    %v632 = vmul.f32 %v568, 0.5
    %v633 = vmul.f32 %v569, 0.5
    %v634 = vmul.f32 %v570, 0.5
    %v635 = vmul.f32 %v571, 0.5
    %636 = vst [vmem:[#allocation2] sm:$0xff] %v572
    %637 = vst [vmem:[#allocation2 + $0x8] sm:$0xff] %v573
    %638 = vst [vmem:[#allocation2 + $0x10] sm:$0xff] %v574
    %639 = vst [vmem:[#allocation2 + $0x18] sm:$0xff] %v575
    %640 = vst [vmem:[#allocation2 + $0x20] sm:$0xff] %v576
    %641 = vst [vmem:[#allocation2 + $0x28] sm:$0xff] %v577
    %642 = vst [vmem:[#allocation2 + $0x30] sm:$0xff] %v578
    %643 = vst [vmem:[#allocation2 + $0x38] sm:$0xff] %v579
    %644 = vst [vmem:[#allocation2 + $0x40] sm:$0xff] %v580
    %645 = vst [vmem:[#allocation2 + $0x48] sm:$0xff] %v581
    %646 = vst [vmem:[#allocation2 + $0x50] sm:$0xff] %v582
    %647 = vst [vmem:[#allocation2 + $0x58] sm:$0xff] %v583
    %648 = vst [vmem:[#allocation2 + $0x60] sm:$0xff] %v584
    %649 = vst [vmem:[#allocation2 + $0x68] sm:$0xff] %v585
    %650 = vst [vmem:[#allocation2 + $0x70] sm:$0xff] %v586
    %651 = vst [vmem:[#allocation2 + $0x78] sm:$0xff] %v587
    %652 = vst [vmem:[#allocation2 + $0x80] sm:$0xff] %v588
    %653 = vst [vmem:[#allocation2 + $0x88] sm:$0xff] %v589
    %654 = vst [vmem:[#allocation2 + $0x90] sm:$0xff] %v590
    %655 = vst [vmem:[#allocation2 + $0x98] sm:$0xff] %v591
    %656 = vst [vmem:[#allocation2 + $0xa0] sm:$0xff] %v592
    %657 = vst [vmem:[#allocation2 + $0xa8] sm:$0xff] %v593
    %658 = vst [vmem:[#allocation2 + $0xb0] sm:$0xff] %v594
    %659 = vst [vmem:[#allocation2 + $0xb8] sm:$0xff] %v595
    %660 = vst [vmem:[#allocation2 + $0xc0] sm:$0xff] %v596
    %661 = vst [vmem:[#allocation2 + $0xc8] sm:$0xff] %v597
    %662 = vst [vmem:[#allocation2 + $0xd0] sm:$0xff] %v598
    %663 = vst [vmem:[#allocation2 + $0xd8] sm:$0xff] %v599
    %664 = vst [vmem:[#allocation2 + $0xe0] sm:$0xff] %v600
    %665 = vst [vmem:[#allocation2 + $0xe8] sm:$0xff] %v601
    %666 = vst [vmem:[#allocation2 + $0xf0] sm:$0xff] %v602
    %667 = vst [vmem:[#allocation2 + $0xf8] sm:$0xff] %v603
    %668 = vst [vmem:[#allocation2 + $0x100] sm:$0xff] %v604
    %669 = vst [vmem:[#allocation2 + $0x108] sm:$0xff] %v605
    %670 = vst [vmem:[#allocation2 + $0x110] sm:$0xff] %v606
    %671 = vst [vmem:[#allocation2 + $0x118] sm:$0xff] %v607
    %672 = vst [vmem:[#allocation2 + $0x120] sm:$0xff] %v608
    %673 = vst [vmem:[#allocation2 + $0x128] sm:$0xff] %v609
    %674 = vst [vmem:[#allocation2 + $0x130] sm:$0xff] %v610
    %675 = vst [vmem:[#allocation2 + $0x138] sm:$0xff] %v611
    %676 = vst [vmem:[#allocation2 + $0x140] sm:$0xff] %v612
    %677 = vst [vmem:[#allocation2 + $0x148] sm:$0xff] %v613
    %678 = vst [vmem:[#allocation2 + $0x150] sm:$0xff] %v614
    %679 = vst [vmem:[#allocation2 + $0x158] sm:$0xff] %v615
    %680 = vst [vmem:[#allocation2 + $0x160] sm:$0xff] %v616
    %681 = vst [vmem:[#allocation2 + $0x168] sm:$0xff] %v617
    %682 = vst [vmem:[#allocation2 + $0x170] sm:$0xff] %v618
    %683 = vst [vmem:[#allocation2 + $0x178] sm:$0xff] %v619
    %684 = vst [vmem:[#allocation2 + $0x180] sm:$0xff] %v620
    %685 = vst [vmem:[#allocation2 + $0x188] sm:$0xff] %v621
    %686 = vst [vmem:[#allocation2 + $0x190] sm:$0xff] %v622
    %687 = vst [vmem:[#allocation2 + $0x198] sm:$0xff] %v623
    %688 = vst [vmem:[#allocation2 + $0x1a0] sm:$0xff] %v624
    %689 = vst [vmem:[#allocation2 + $0x1a8] sm:$0xff] %v625
    %690 = vst [vmem:[#allocation2 + $0x1b0] sm:$0xff] %v626
    %691 = vst [vmem:[#allocation2 + $0x1b8] sm:$0xff] %v627
    %692 = vst [vmem:[#allocation2 + $0x1c0] sm:$0xff] %v628
    %693 = vst [vmem:[#allocation2 + $0x1c8] sm:$0xff] %v629
    %694 = vst [vmem:[#allocation2 + $0x1d0] sm:$0xff] %v630
    %695 = vst [vmem:[#allocation2 + $0x1d8] sm:$0xff] %v631
    %696 = vst [vmem:[#allocation2 + $0x1e0] sm:$0xff] %v632
    %697 = vst [vmem:[#allocation2 + $0x1e8] sm:$0xff] %v633
    %698 = vst [vmem:[#allocation2 + $0x1f0] sm:$0xff] %v634
    %699 = vst [vmem:[#allocation2 + $0x1f8] sm:$0xff] %v635
    // Predicated region
    $region10: #{tpu_custom_call.1} parent=1 // pred_check
      _
    $region11: #{tpu_custom_call.1} parent=1 // pred_check_branch
      %701 = sbr.rel (0) target = $region13
    $region12: #{tpu_custom_call.1} parent=1 // pred_region
      %703 = vsyncadd [#allocation3], 0
      %s704 = sshll.u32 [#allocation2], 4
      %s705 = int_to_ptr.vmem [resolvable:$true] %s704
      %s706 = sshll.u32 %s2, 4
      %s707 = int_to_ptr.hbm [resolvable:$true] %s706
      %712 = dma.vmem_to_hbm [thread:$0]  %s705, 8192, %s707, [#allocation3], 256, 256, 16
    $region13: #{tpu_custom_call.1} parent=1 // pred_fallthru
      _
    // Predicated region
    $region14: #{tpu_custom_call.1} parent=1 // pred_check
      _
    $region15: #{tpu_custom_call.1} parent=1 // pred_check_branch
      %714 = sbr.rel (0) target = $region17
    $region16: #{tpu_custom_call.1} parent=1 // pred_region
      %716 = dma.done [#allocation3], 8192
    $region17: #{tpu_custom_call.1} parent=1 // pred_fallthru
      _
    %717 = vsyncpa [#allocation3], 1

// kernel: tpu_custom_call.1
$region0: #{tpu_custom_call.1}
  #allocation0 [shape = 'u32[]', space=smem, size = 0x4, offset = 0x4, fixed_abs, tag = 'smem constant byte address 0x4 - core index']
  #allocation1 [shape = 'u32[72,128]{1,0:T(1,128)}', space=vmem, size = 0x9000, scoped, tag = 'internal scratch']
  %s0 = inlined_call_operand.vmem [shape: f32[256,32], index: 0, kind: input, shape index: {}]
  %s1 = inlined_call_operand.vmem [shape: f32[32,256], index: 1, kind: input, shape index: {}]
  %s2 = inlined_call_operand.hbm [shape: f32[256,256], index: 2, kind: output, shape index: {}]
  %s3 = sld [smem:[#allocation0]]
  $region18: #{tpu_custom_call.1} parent=0
    _
  %s5 = ssub.s32 1, %s3
  %s6 = scalar_select 0, %s5, %s3
  $region1: #{tpu_custom_call.1} parent=0
    #allocation2 [shape = 'u8[262144]{0}', space=vmem, size = 0x40000, scoped, tag = 'output window, operand 0, single buffered']
    #allocation3 [shape = 's32[1]{0}', space=sflag, size = 0x4, scoped, tag = 'scoped memory for tpu_custom_call.1']
    %7 = vsyncpa [#allocation3], 0
    // Predicated region
    $region2: #{tpu_custom_call.1} parent=1 // pred_check
      _
    $region3: #{tpu_custom_call.1} parent=1 // pred_check_branch
      %9 = sbr.rel (0) target = $region5
    $region4: #{tpu_custom_call.1} parent=1 // pred_region
      _
    $region5: #{tpu_custom_call.1} parent=1 // pred_fallthru
      _
    // Predicated region
    $region6: #{tpu_custom_call.1} parent=1 // pred_check
      _
    $region7: #{tpu_custom_call.1} parent=1 // pred_check_branch
      %11 = sbr.rel (0) target = $region9
    $region8: #{tpu_custom_call.1} parent=1 // pred_region
      _
    $region9: #{tpu_custom_call.1} parent=1 // pred_fallthru
      _
    %s12 = smul.u32 0, 256
    %s13 = sshra.s32 %s12, 7
    %s14 = sand.u32 %s12, 127
    %s15 = smul.addr %s13, 8
    %s16 = scalar_lea.vmem %s1, %s15
    %v17 = vld [vmem:[%s16] sm:$0xff]
    %v18 = vld [vmem:[%s16 + $0x8] sm:$0xff]
    %v19 = vld [vmem:[%s16 + $0x10] sm:$0xff]
    %v20 = vld [vmem:[%s16 + $0x18] sm:$0xff]
    %v21 = vld [vmem:[%s16 + $0x20] sm:$0xff]
    %v22 = vld [vmem:[%s16 + $0x28] sm:$0xff]
    %v23 = vld [vmem:[%s16 + $0x30] sm:$0xff]
    %v24 = vld [vmem:[%s16 + $0x38] sm:$0xff]
    %v25 = vld [vmem:[%s0] sm:$0xff]
    %v26 = vld [vmem:[%s0 + $0x8] sm:$0xff]
    %v27 = vld [vmem:[%s0 + $0x10] sm:$0xff]
    %v28 = vld [vmem:[%s0 + $0x18] sm:$0xff]
    %v29 = vld [vmem:[%s0 + $0x20] sm:$0xff]
    %v30 = vld [vmem:[%s0 + $0x28] sm:$0xff]
    %v31 = vld [vmem:[%s0 + $0x30] sm:$0xff]
    %v32 = vld [vmem:[%s0 + $0x38] sm:$0xff]
    %v33 = vld [vmem:[%s0 + $0x40] sm:$0xff]
    %v34 = vld [vmem:[%s0 + $0x48] sm:$0xff]
    %v35 = vld [vmem:[%s0 + $0x50] sm:$0xff]
    %v36 = vld [vmem:[%s0 + $0x58] sm:$0xff]
    %v37 = vld [vmem:[%s0 + $0x60] sm:$0xff]
    %v38 = vld [vmem:[%s0 + $0x68] sm:$0xff]
    %v39 = vld [vmem:[%s0 + $0x70] sm:$0xff]
    %v40 = vld [vmem:[%s0 + $0x78] sm:$0xff]
    %v41 = vld [vmem:[%s0 + $0x80] sm:$0xff]
    %v42 = vld [vmem:[%s0 + $0x88] sm:$0xff]
    %v43 = vld [vmem:[%s0 + $0x90] sm:$0xff]
    %v44 = vld [vmem:[%s0 + $0x98] sm:$0xff]
    %v45 = vld [vmem:[%s0 + $0xa0] sm:$0xff]
    %v46 = vld [vmem:[%s0 + $0xa8] sm:$0xff]
    %v47 = vld [vmem:[%s0 + $0xb0] sm:$0xff]
    %v48 = vld [vmem:[%s0 + $0xb8] sm:$0xff]
    %v49 = vld [vmem:[%s0 + $0xc0] sm:$0xff]
    %v50 = vld [vmem:[%s0 + $0xc8] sm:$0xff]
    %v51 = vld [vmem:[%s0 + $0xd0] sm:$0xff]
    %v52 = vld [vmem:[%s0 + $0xd8] sm:$0xff]
    %v53 = vld [vmem:[%s0 + $0xe0] sm:$0xff]
    %v54 = vld [vmem:[%s0 + $0xe8] sm:$0xff]
    %v55 = vld [vmem:[%s0 + $0xf0] sm:$0xff]
    %v56 = vld [vmem:[%s0 + $0xf8] sm:$0xff]
    %vm57 = vcmask 261120
    %v59 = vsel %vm57, %v25, 0
    %v62 = vsel %vm57, %v26, 0
    %v65 = vsel %vm57, %v27, 0
    %v68 = vsel %vm57, %v28, 0
    %v71 = vsel %vm57, %v29, 0
    %v74 = vsel %vm57, %v30, 0
    %v77 = vsel %vm57, %v31, 0
    %v80 = vsel %vm57, %v32, 0
    %v83 = vsel %vm57, %v33, 0
    %v86 = vsel %vm57, %v34, 0
    %v89 = vsel %vm57, %v35, 0
    %v92 = vsel %vm57, %v36, 0
    %v95 = vsel %vm57, %v37, 0
    %v98 = vsel %vm57, %v38, 0
    %v101 = vsel %vm57, %v39, 0
    %v104 = vsel %vm57, %v40, 0
    %v107 = vsel %vm57, %v41, 0
    %v110 = vsel %vm57, %v42, 0
    %v113 = vsel %vm57, %v43, 0
    %v116 = vsel %vm57, %v44, 0
    %v119 = vsel %vm57, %v45, 0
    %v122 = vsel %vm57, %v46, 0
    %v125 = vsel %vm57, %v47, 0
    %v128 = vsel %vm57, %v48, 0
    %v131 = vsel %vm57, %v49, 0
    %v134 = vsel %vm57, %v50, 0
    %v137 = vsel %vm57, %v51, 0
    %v140 = vsel %vm57, %v52, 0
    %v143 = vsel %vm57, %v53, 0
    %v146 = vsel %vm57, %v54, 0
    %v149 = vsel %vm57, %v55, 0
    %v152 = vsel %vm57, %v56, 0
    %154 = vmatpush.msra.mxu0 0.0
    %155 = vmatpush.msra.mxu0 0.0
    %156 = vmatpush.msra.mxu0 0.0
    %157 = vmatpush.msra.mxu0 0.0
    %158 = vmatpush.msra.mxu0 0.0
    %159 = vmatpush.msra.mxu0 0.0
    %160 = vmatpush.msra.mxu0 0.0
    %161 = vmatpush.msra.mxu0 0.0
    %162 = vmatpush.msra.mxu0 0.0
    %163 = vmatpush.msra.mxu0 0.0
    %164 = vmatpush.msra.mxu0 0.0
    %165 = vmatpush.msra.mxu0 0.0
    %166 = vmatpush.msra.mxu0 %v23
    %167 = vmatpush.msra.mxu0 %v21
    %168 = vmatpush.msra.mxu0 %v19
    %169 = vmatpush.msra.mxu0 %v17
    %170 = vmatmul.f32.gmra.mxu0 %v59
    %v171 = vpop.f32.mrf.mxu0
    %v172 = vadd.f32 0.0, %v171
    %173 = vmatmul.f32.gmra.mxu0 %v62
    %v174 = vpop.f32.mrf.mxu0
    %v175 = vadd.f32 0.0, %v174
    %176 = vmatmul.f32.gmra.mxu0 %v65
    %v177 = vpop.f32.mrf.mxu0
    %v178 = vadd.f32 0.0, %v177
    %179 = vmatmul.f32.gmra.mxu0 %v68
    %v180 = vpop.f32.mrf.mxu0
    %v181 = vadd.f32 0.0, %v180
    %182 = vmatmul.f32.gmra.mxu0 %v71
    %v183 = vpop.f32.mrf.mxu0
    %v184 = vadd.f32 0.0, %v183
    %185 = vmatmul.f32.gmra.mxu0 %v74
    %v186 = vpop.f32.mrf.mxu0
    %v187 = vadd.f32 0.0, %v186
    %188 = vmatmul.f32.gmra.mxu0 %v77
    %v189 = vpop.f32.mrf.mxu0
    %v190 = vadd.f32 0.0, %v189
    %191 = vmatmul.f32.gmra.mxu0 %v80
    %v192 = vpop.f32.mrf.mxu0
    %v193 = vadd.f32 0.0, %v192
    %194 = vmatmul.f32.gmra.mxu0 %v83
    %v195 = vpop.f32.mrf.mxu0
    %v196 = vadd.f32 0.0, %v195
    %197 = vmatmul.f32.gmra.mxu0 %v86
    %v198 = vpop.f32.mrf.mxu0
    %v199 = vadd.f32 0.0, %v198
    %200 = vmatmul.f32.gmra.mxu0 %v89
    %v201 = vpop.f32.mrf.mxu0
    %v202 = vadd.f32 0.0, %v201
    %203 = vmatmul.f32.gmra.mxu0 %v92
    %v204 = vpop.f32.mrf.mxu0
    %v205 = vadd.f32 0.0, %v204
    %206 = vmatmul.f32.gmra.mxu0 %v95
    %v207 = vpop.f32.mrf.mxu0
    %v208 = vadd.f32 0.0, %v207
    %209 = vmatmul.f32.gmra.mxu0 %v98
    %v210 = vpop.f32.mrf.mxu0
    %v211 = vadd.f32 0.0, %v210
    %212 = vmatmul.f32.gmra.mxu0 %v101
    %v213 = vpop.f32.mrf.mxu0
    %v214 = vadd.f32 0.0, %v213
    %215 = vmatmul.f32.gmra.mxu0 %v104
    %v216 = vpop.f32.mrf.mxu0
    %v217 = vadd.f32 0.0, %v216
    %218 = vmatmul.f32.gmra.mxu0 %v107
    %v219 = vpop.f32.mrf.mxu0
    %v220 = vadd.f32 0.0, %v219
    %221 = vmatmul.f32.gmra.mxu0 %v110
    %v222 = vpop.f32.mrf.mxu0
    %v223 = vadd.f32 0.0, %v222
    %224 = vmatmul.f32.gmra.mxu0 %v113
    %v225 = vpop.f32.mrf.mxu0
    %v226 = vadd.f32 0.0, %v225
    %227 = vmatmul.f32.gmra.mxu0 %v116
    %v228 = vpop.f32.mrf.mxu0
    %v229 = vadd.f32 0.0, %v228
    %230 = vmatmul.f32.gmra.mxu0 %v119
    %v231 = vpop.f32.mrf.mxu0
    %v232 = vadd.f32 0.0, %v231
    %233 = vmatmul.f32.gmra.mxu0 %v122
    %v234 = vpop.f32.mrf.mxu0
    %v235 = vadd.f32 0.0, %v234
    %236 = vmatmul.f32.gmra.mxu0 %v125
    %v237 = vpop.f32.mrf.mxu0
    %v238 = vadd.f32 0.0, %v237
    %239 = vmatmul.f32.gmra.mxu0 %v128
    %v240 = vpop.f32.mrf.mxu0
    %v241 = vadd.f32 0.0, %v240
    %242 = vmatmul.f32.gmra.mxu0 %v131
    %v243 = vpop.f32.mrf.mxu0
    %v244 = vadd.f32 0.0, %v243
    %245 = vmatmul.f32.gmra.mxu0 %v134
    %v246 = vpop.f32.mrf.mxu0
    %v247 = vadd.f32 0.0, %v246
    %248 = vmatmul.f32.gmra.mxu0 %v137
    %v249 = vpop.f32.mrf.mxu0
    %v250 = vadd.f32 0.0, %v249
    %251 = vmatmul.f32.gmra.mxu0 %v140
    %v252 = vpop.f32.mrf.mxu0
    %v253 = vadd.f32 0.0, %v252
    %254 = vmatmul.f32.gmra.mxu0 %v143
    %v255 = vpop.f32.mrf.mxu0
    %v256 = vadd.f32 0.0, %v255
    %257 = vmatmul.f32.gmra.mxu0 %v146
    %v258 = vpop.f32.mrf.mxu0
    %v259 = vadd.f32 0.0, %v258
    %260 = vmatmul.f32.gmra.mxu0 %v149
    %v261 = vpop.f32.mrf.mxu0
    %v262 = vadd.f32 0.0, %v261
    %263 = vmatmul.f32.gmra.mxu0 %v152
    %v264 = vpop.f32.mrf.mxu0
    %v265 = vadd.f32 0.0, %v264
    %266 = vdwg.mxu0
    %267 = vmatpush.msra.mxu0 0.0
    %268 = vmatpush.msra.mxu0 0.0
    %269 = vmatpush.msra.mxu0 0.0
    %270 = vmatpush.msra.mxu0 0.0
    %271 = vmatpush.msra.mxu0 0.0
    %272 = vmatpush.msra.mxu0 0.0
    %273 = vmatpush.msra.mxu0 0.0
    %274 = vmatpush.msra.mxu0 0.0
    %275 = vmatpush.msra.mxu0 0.0
    %276 = vmatpush.msra.mxu0 0.0
    %277 = vmatpush.msra.mxu0 0.0
    %278 = vmatpush.msra.mxu0 0.0
    %279 = vmatpush.msra.mxu0 %v24
    %280 = vmatpush.msra.mxu0 %v22
    %281 = vmatpush.msra.mxu0 %v20
    %282 = vmatpush.msra.mxu0 %v18
    %283 = vmatmul.f32.gmra.mxu0 %v59
    %v284 = vpop.f32.mrf.mxu0
    %v285 = vadd.f32 0.0, %v284
    %286 = vmatmul.f32.gmra.mxu0 %v62
    %v287 = vpop.f32.mrf.mxu0
    %v288 = vadd.f32 0.0, %v287
    %289 = vmatmul.f32.gmra.mxu0 %v65
    %v290 = vpop.f32.mrf.mxu0
    %v291 = vadd.f32 0.0, %v290
    %292 = vmatmul.f32.gmra.mxu0 %v68
    %v293 = vpop.f32.mrf.mxu0
    %v294 = vadd.f32 0.0, %v293
    %295 = vmatmul.f32.gmra.mxu0 %v71
    %v296 = vpop.f32.mrf.mxu0
    %v297 = vadd.f32 0.0, %v296
    %298 = vmatmul.f32.gmra.mxu0 %v74
    %v299 = vpop.f32.mrf.mxu0
    %v300 = vadd.f32 0.0, %v299
    %301 = vmatmul.f32.gmra.mxu0 %v77
    %v302 = vpop.f32.mrf.mxu0
    %v303 = vadd.f32 0.0, %v302
    %304 = vmatmul.f32.gmra.mxu0 %v80
    %v305 = vpop.f32.mrf.mxu0
    %v306 = vadd.f32 0.0, %v305
    %307 = vmatmul.f32.gmra.mxu0 %v83
    %v308 = vpop.f32.mrf.mxu0
    %v309 = vadd.f32 0.0, %v308
    %310 = vmatmul.f32.gmra.mxu0 %v86
    %v311 = vpop.f32.mrf.mxu0
    %v312 = vadd.f32 0.0, %v311
    %313 = vmatmul.f32.gmra.mxu0 %v89
    %v314 = vpop.f32.mrf.mxu0
    %v315 = vadd.f32 0.0, %v314
    %316 = vmatmul.f32.gmra.mxu0 %v92
    %v317 = vpop.f32.mrf.mxu0
    %v318 = vadd.f32 0.0, %v317
    %319 = vmatmul.f32.gmra.mxu0 %v95
    %v320 = vpop.f32.mrf.mxu0
    %v321 = vadd.f32 0.0, %v320
    %322 = vmatmul.f32.gmra.mxu0 %v98
    %v323 = vpop.f32.mrf.mxu0
    %v324 = vadd.f32 0.0, %v323
    %325 = vmatmul.f32.gmra.mxu0 %v101
    %v326 = vpop.f32.mrf.mxu0
    %v327 = vadd.f32 0.0, %v326
    %328 = vmatmul.f32.gmra.mxu0 %v104
    %v329 = vpop.f32.mrf.mxu0
    %v330 = vadd.f32 0.0, %v329
    %331 = vmatmul.f32.gmra.mxu0 %v107
    %v332 = vpop.f32.mrf.mxu0
    %v333 = vadd.f32 0.0, %v332
    %334 = vmatmul.f32.gmra.mxu0 %v110
    %v335 = vpop.f32.mrf.mxu0
    %v336 = vadd.f32 0.0, %v335
    %337 = vmatmul.f32.gmra.mxu0 %v113
    %v338 = vpop.f32.mrf.mxu0
    %v339 = vadd.f32 0.0, %v338
    %340 = vmatmul.f32.gmra.mxu0 %v116
    %v341 = vpop.f32.mrf.mxu0
    %v342 = vadd.f32 0.0, %v341
    %343 = vmatmul.f32.gmra.mxu0 %v119
    %v344 = vpop.f32.mrf.mxu0
    %v345 = vadd.f32 0.0, %v344
    %346 = vmatmul.f32.gmra.mxu0 %v122
    %v347 = vpop.f32.mrf.mxu0
    %v348 = vadd.f32 0.0, %v347
    %349 = vmatmul.f32.gmra.mxu0 %v125
    %v350 = vpop.f32.mrf.mxu0
    %v351 = vadd.f32 0.0, %v350
    %352 = vmatmul.f32.gmra.mxu0 %v128
    %v353 = vpop.f32.mrf.mxu0
    %v354 = vadd.f32 0.0, %v353
    %355 = vmatmul.f32.gmra.mxu0 %v131
    %v356 = vpop.f32.mrf.mxu0
    %v357 = vadd.f32 0.0, %v356
    %358 = vmatmul.f32.gmra.mxu0 %v134
    %v359 = vpop.f32.mrf.mxu0
    %v360 = vadd.f32 0.0, %v359
    %361 = vmatmul.f32.gmra.mxu0 %v137
    %v362 = vpop.f32.mrf.mxu0
    %v363 = vadd.f32 0.0, %v362
    %364 = vmatmul.f32.gmra.mxu0 %v140
    %v365 = vpop.f32.mrf.mxu0
    %v366 = vadd.f32 0.0, %v365
    %367 = vmatmul.f32.gmra.mxu0 %v143
    %v368 = vpop.f32.mrf.mxu0
    %v369 = vadd.f32 0.0, %v368
    %370 = vmatmul.f32.gmra.mxu0 %v146
    %v371 = vpop.f32.mrf.mxu0
    %v372 = vadd.f32 0.0, %v371
    %373 = vmatmul.f32.gmra.mxu0 %v149
    %v374 = vpop.f32.mrf.mxu0
    %v375 = vadd.f32 0.0, %v374
    %376 = vmatmul.f32.gmra.mxu0 %v152
    %v377 = vpop.f32.mrf.mxu0
    %v378 = vadd.f32 0.0, %v377
    %379 = vdwg.mxu0
    %v380 = vmul.f32 %v172, 0.5
    %v381 = vmul.f32 %v285, 0.5
    %v382 = vmul.f32 %v175, 0.5
    %v383 = vmul.f32 %v288, 0.5
    %v384 = vmul.f32 %v178, 0.5
    %v385 = vmul.f32 %v291, 0.5
    %v386 = vmul.f32 %v181, 0.5
    %v387 = vmul.f32 %v294, 0.5
    %v388 = vmul.f32 %v184, 0.5
    %v389 = vmul.f32 %v297, 0.5
    %v390 = vmul.f32 %v187, 0.5
    %v391 = vmul.f32 %v300, 0.5
    %v392 = vmul.f32 %v190, 0.5
    %v393 = vmul.f32 %v303, 0.5
    %v394 = vmul.f32 %v193, 0.5
    %v395 = vmul.f32 %v306, 0.5
    %v396 = vmul.f32 %v196, 0.5
    %v397 = vmul.f32 %v309, 0.5
    %v398 = vmul.f32 %v199, 0.5
    %v399 = vmul.f32 %v312, 0.5
    %v400 = vmul.f32 %v202, 0.5
    %v401 = vmul.f32 %v315, 0.5
    %v402 = vmul.f32 %v205, 0.5
    %v403 = vmul.f32 %v318, 0.5
    %v404 = vmul.f32 %v208, 0.5
    %v405 = vmul.f32 %v321, 0.5
    %v406 = vmul.f32 %v211, 0.5
    %v407 = vmul.f32 %v324, 0.5
    %v408 = vmul.f32 %v214, 0.5
    %v409 = vmul.f32 %v327, 0.5
    %v410 = vmul.f32 %v217, 0.5
    %v411 = vmul.f32 %v330, 0.5
    %v412 = vmul.f32 %v220, 0.5
    %v413 = vmul.f32 %v333, 0.5
    %v414 = vmul.f32 %v223, 0.5
    %v415 = vmul.f32 %v336, 0.5
    %v416 = vmul.f32 %v226, 0.5
    %v417 = vmul.f32 %v339, 0.5
    %v418 = vmul.f32 %v229, 0.5
    %v419 = vmul.f32 %v342, 0.5
    %v420 = vmul.f32 %v232, 0.5
    %v421 = vmul.f32 %v345, 0.5
    %v422 = vmul.f32 %v235, 0.5
    %v423 = vmul.f32 %v348, 0.5
    %v424 = vmul.f32 %v238, 0.5
    %v425 = vmul.f32 %v351, 0.5
    %v426 = vmul.f32 %v241, 0.5
    %v427 = vmul.f32 %v354, 0.5
    %v428 = vmul.f32 %v244, 0.5
    %v429 = vmul.f32 %v357, 0.5
    %v430 = vmul.f32 %v247, 0.5
    %v431 = vmul.f32 %v360, 0.5
    %v432 = vmul.f32 %v250, 0.5
    %v433 = vmul.f32 %v363, 0.5
    %v434 = vmul.f32 %v253, 0.5
    %v435 = vmul.f32 %v366, 0.5
    %v436 = vmul.f32 %v256, 0.5
    %v437 = vmul.f32 %v369, 0.5
    %v438 = vmul.f32 %v259, 0.5
    %v439 = vmul.f32 %v372, 0.5
    %v440 = vmul.f32 %v262, 0.5
    %v441 = vmul.f32 %v375, 0.5
    %v442 = vmul.f32 %v265, 0.5
    %v443 = vmul.f32 %v378, 0.5
    %v444 = vtanh.pop %v380
    %v445 = vtanh.pop %v381
    %v446 = vtanh.pop %v382
    %v447 = vtanh.pop %v383
    %v448 = vtanh.pop %v384
    %v449 = vtanh.pop %v385
    %v450 = vtanh.pop %v386
    %v451 = vtanh.pop %v387
    %v452 = vtanh.pop %v388
    %v453 = vtanh.pop %v389
    %v454 = vtanh.pop %v390
    %v455 = vtanh.pop %v391
    %v456 = vtanh.pop %v392
    %v457 = vtanh.pop %v393
    %v458 = vtanh.pop %v394
    %v459 = vtanh.pop %v395
    %v460 = vtanh.pop %v396
    %v461 = vtanh.pop %v397
    %v462 = vtanh.pop %v398
    %v463 = vtanh.pop %v399
    %v464 = vtanh.pop %v400
    %v465 = vtanh.pop %v401
    %v466 = vtanh.pop %v402
    %v467 = vtanh.pop %v403
    %v468 = vtanh.pop %v404
    %v469 = vtanh.pop %v405
    %v470 = vtanh.pop %v406
    %v471 = vtanh.pop %v407
    %v472 = vtanh.pop %v408
    %v473 = vtanh.pop %v409
    %v474 = vtanh.pop %v410
    %v475 = vtanh.pop %v411
    %v476 = vtanh.pop %v412
    %v477 = vtanh.pop %v413
    %v478 = vtanh.pop %v414
    %v479 = vtanh.pop %v415
    %v480 = vtanh.pop %v416
    %v481 = vtanh.pop %v417
    %v482 = vtanh.pop %v418
    %v483 = vtanh.pop %v419
    %v484 = vtanh.pop %v420
    %v485 = vtanh.pop %v421
    %v486 = vtanh.pop %v422
    %v487 = vtanh.pop %v423
    %v488 = vtanh.pop %v424
    %v489 = vtanh.pop %v425
    %v490 = vtanh.pop %v426
    %v491 = vtanh.pop %v427
    %v492 = vtanh.pop %v428
    %v493 = vtanh.pop %v429
    %v494 = vtanh.pop %v430
    %v495 = vtanh.pop %v431
    %v496 = vtanh.pop %v432
    %v497 = vtanh.pop %v433
    %v498 = vtanh.pop %v434
    %v499 = vtanh.pop %v435
    %v500 = vtanh.pop %v436
    %v501 = vtanh.pop %v437
    %v502 = vtanh.pop %v438
    %v503 = vtanh.pop %v439
    %v504 = vtanh.pop %v440
    %v505 = vtanh.pop %v441
    %v506 = vtanh.pop %v442
    %v507 = vtanh.pop %v443
    %v508 = vadd.f32 %v444, 1.0
    %v509 = vadd.f32 %v445, 1.0
    %v510 = vadd.f32 %v446, 1.0
    %v511 = vadd.f32 %v447, 1.0
    %v512 = vadd.f32 %v448, 1.0
    %v513 = vadd.f32 %v449, 1.0
    %v514 = vadd.f32 %v450, 1.0
    %v515 = vadd.f32 %v451, 1.0
    %v516 = vadd.f32 %v452, 1.0
    %v517 = vadd.f32 %v453, 1.0
    %v518 = vadd.f32 %v454, 1.0
    %v519 = vadd.f32 %v455, 1.0
    %v520 = vadd.f32 %v456, 1.0
    %v521 = vadd.f32 %v457, 1.0
    %v522 = vadd.f32 %v458, 1.0
    %v523 = vadd.f32 %v459, 1.0
    %v524 = vadd.f32 %v460, 1.0
    %v525 = vadd.f32 %v461, 1.0
    %v526 = vadd.f32 %v462, 1.0
    %v527 = vadd.f32 %v463, 1.0
    %v528 = vadd.f32 %v464, 1.0
    %v529 = vadd.f32 %v465, 1.0
    %v530 = vadd.f32 %v466, 1.0
    %v531 = vadd.f32 %v467, 1.0
    %v532 = vadd.f32 %v468, 1.0
    %v533 = vadd.f32 %v469, 1.0
    %v534 = vadd.f32 %v470, 1.0
    %v535 = vadd.f32 %v471, 1.0
    %v536 = vadd.f32 %v472, 1.0
    %v537 = vadd.f32 %v473, 1.0
    %v538 = vadd.f32 %v474, 1.0
    %v539 = vadd.f32 %v475, 1.0
    %v540 = vadd.f32 %v476, 1.0
    %v541 = vadd.f32 %v477, 1.0
    %v542 = vadd.f32 %v478, 1.0
    %v543 = vadd.f32 %v479, 1.0
    %v544 = vadd.f32 %v480, 1.0
    %v545 = vadd.f32 %v481, 1.0
    %v546 = vadd.f32 %v482, 1.0
    %v547 = vadd.f32 %v483, 1.0
    %v548 = vadd.f32 %v484, 1.0
    %v549 = vadd.f32 %v485, 1.0
    %v550 = vadd.f32 %v486, 1.0
    %v551 = vadd.f32 %v487, 1.0
    %v552 = vadd.f32 %v488, 1.0
    %v553 = vadd.f32 %v489, 1.0
    %v554 = vadd.f32 %v490, 1.0
    %v555 = vadd.f32 %v491, 1.0
    %v556 = vadd.f32 %v492, 1.0
    %v557 = vadd.f32 %v493, 1.0
    %v558 = vadd.f32 %v494, 1.0
    %v559 = vadd.f32 %v495, 1.0
    %v560 = vadd.f32 %v496, 1.0
    %v561 = vadd.f32 %v497, 1.0
    %v562 = vadd.f32 %v498, 1.0
    %v563 = vadd.f32 %v499, 1.0
    %v564 = vadd.f32 %v500, 1.0
    %v565 = vadd.f32 %v501, 1.0
    %v566 = vadd.f32 %v502, 1.0
    %v567 = vadd.f32 %v503, 1.0
    %v568 = vadd.f32 %v504, 1.0
    %v569 = vadd.f32 %v505, 1.0
    %v570 = vadd.f32 %v506, 1.0
    %v571 = vadd.f32 %v507, 1.0
    %v572 = vmul.f32 %v508, 0.5
    %v573 = vmul.f32 %v509, 0.5
    %v574 = vmul.f32 %v510, 0.5
    %v575 = vmul.f32 %v511, 0.5
    %v576 = vmul.f32 %v512, 0.5
    %v577 = vmul.f32 %v513, 0.5
    %v578 = vmul.f32 %v514, 0.5
    %v579 = vmul.f32 %v515, 0.5
    %v580 = vmul.f32 %v516, 0.5
    %v581 = vmul.f32 %v517, 0.5
    %v582 = vmul.f32 %v518, 0.5
    %v583 = vmul.f32 %v519, 0.5
    %v584 = vmul.f32 %v520, 0.5
    %v585 = vmul.f32 %v521, 0.5
    %v586 = vmul.f32 %v522, 0.5
    %v587 = vmul.f32 %v523, 0.5
    %v588 = vmul.f32 %v524, 0.5
    %v589 = vmul.f32 %v525, 0.5
    %v590 = vmul.f32 %v526, 0.5
    %v591 = vmul.f32 %v527, 0.5
    %v592 = vmul.f32 %v528, 0.5
    %v593 = vmul.f32 %v529, 0.5
    %v594 = vmul.f32 %v530, 0.5
    %v595 = vmul.f32 %v531, 0.5
    %v596 = vmul.f32 %v532, 0.5
    %v597 = vmul.f32 %v533, 0.5
    %v598 = vmul.f32 %v534, 0.5
    %v599 = vmul.f32 %v535, 0.5
    %v600 = vmul.f32 %v536, 0.5
    %v601 = vmul.f32 %v537, 0.5
    %v602 = vmul.f32 %v538, 0.5
    %v603 = vmul.f32 %v539, 0.5
    %v604 = vmul.f32 %v540, 0.5
    %v605 = vmul.f32 %v541, 0.5
    %v606 = vmul.f32 %v542, 0.5
    %v607 = vmul.f32 %v543, 0.5
    %v608 = vmul.f32 %v544, 0.5
    %v609 = vmul.f32 %v545, 0.5
    %v610 = vmul.f32 %v546, 0.5
    %v611 = vmul.f32 %v547, 0.5
    %v612 = vmul.f32 %v548, 0.5
    %v613 = vmul.f32 %v549, 0.5
    %v614 = vmul.f32 %v550, 0.5
    %v615 = vmul.f32 %v551, 0.5
    %v616 = vmul.f32 %v552, 0.5
    %v617 = vmul.f32 %v553, 0.5
    %v618 = vmul.f32 %v554, 0.5
    %v619 = vmul.f32 %v555, 0.5
    %v620 = vmul.f32 %v556, 0.5
    %v621 = vmul.f32 %v557, 0.5
    %v622 = vmul.f32 %v558, 0.5
    %v623 = vmul.f32 %v559, 0.5
    %v624 = vmul.f32 %v560, 0.5
    %v625 = vmul.f32 %v561, 0.5
    %v626 = vmul.f32 %v562, 0.5
    %v627 = vmul.f32 %v563, 0.5
    %v628 = vmul.f32 %v564, 0.5
    %v629 = vmul.f32 %v565, 0.5
    %v630 = vmul.f32 %v566, 0.5
    %v631 = vmul.f32 %v567, 0.5
    %v632 = vmul.f32 %v568, 0.5
    %v633 = vmul.f32 %v569, 0.5
    %v634 = vmul.f32 %v570, 0.5
    %v635 = vmul.f32 %v571, 0.5
    %636 = vst [vmem:[#allocation2] sm:$0xff] %v572
    %637 = vst [vmem:[#allocation2 + $0x8] sm:$0xff] %v573
    %638 = vst [vmem:[#allocation2 + $0x10] sm:$0xff] %v574
    %639 = vst [vmem:[#allocation2 + $0x18] sm:$0xff] %v575
    %640 = vst [vmem:[#allocation2 + $0x20] sm:$0xff] %v576
    %641 = vst [vmem:[#allocation2 + $0x28] sm:$0xff] %v577
    %642 = vst [vmem:[#allocation2 + $0x30] sm:$0xff] %v578
    %643 = vst [vmem:[#allocation2 + $0x38] sm:$0xff] %v579
    %644 = vst [vmem:[#allocation2 + $0x40] sm:$0xff] %v580
    %645 = vst [vmem:[#allocation2 + $0x48] sm:$0xff] %v581
    %646 = vst [vmem:[#allocation2 + $0x50] sm:$0xff] %v582
    %647 = vst [vmem:[#allocation2 + $0x58] sm:$0xff] %v583
    %648 = vst [vmem:[#allocation2 + $0x60] sm:$0xff] %v584
    %649 = vst [vmem:[#allocation2 + $0x68] sm:$0xff] %v585
    %650 = vst [vmem:[#allocation2 + $0x70] sm:$0xff] %v586
    %651 = vst [vmem:[#allocation2 + $0x78] sm:$0xff] %v587
    %652 = vst [vmem:[#allocation2 + $0x80] sm:$0xff] %v588
    %653 = vst [vmem:[#allocation2 + $0x88] sm:$0xff] %v589
    %654 = vst [vmem:[#allocation2 + $0x90] sm:$0xff] %v590
    %655 = vst [vmem:[#allocation2 + $0x98] sm:$0xff] %v591
    %656 = vst [vmem:[#allocation2 + $0xa0] sm:$0xff] %v592
    %657 = vst [vmem:[#allocation2 + $0xa8] sm:$0xff] %v593
    %658 = vst [vmem:[#allocation2 + $0xb0] sm:$0xff] %v594
    %659 = vst [vmem:[#allocation2 + $0xb8] sm:$0xff] %v595
    %660 = vst [vmem:[#allocation2 + $0xc0] sm:$0xff] %v596
    %661 = vst [vmem:[#allocation2 + $0xc8] sm:$0xff] %v597
    %662 = vst [vmem:[#allocation2 + $0xd0] sm:$0xff] %v598
    %663 = vst [vmem:[#allocation2 + $0xd8] sm:$0xff] %v599
    %664 = vst [vmem:[#allocation2 + $0xe0] sm:$0xff] %v600
    %665 = vst [vmem:[#allocation2 + $0xe8] sm:$0xff] %v601
    %666 = vst [vmem:[#allocation2 + $0xf0] sm:$0xff] %v602
    %667 = vst [vmem:[#allocation2 + $0xf8] sm:$0xff] %v603
    %668 = vst [vmem:[#allocation2 + $0x100] sm:$0xff] %v604
    %669 = vst [vmem:[#allocation2 + $0x108] sm:$0xff] %v605
    %670 = vst [vmem:[#allocation2 + $0x110] sm:$0xff] %v606
    %671 = vst [vmem:[#allocation2 + $0x118] sm:$0xff] %v607
    %672 = vst [vmem:[#allocation2 + $0x120] sm:$0xff] %v608
    %673 = vst [vmem:[#allocation2 + $0x128] sm:$0xff] %v609
    %674 = vst [vmem:[#allocation2 + $0x130] sm:$0xff] %v610
    %675 = vst [vmem:[#allocation2 + $0x138] sm:$0xff] %v611
    %676 = vst [vmem:[#allocation2 + $0x140] sm:$0xff] %v612
    %677 = vst [vmem:[#allocation2 + $0x148] sm:$0xff] %v613
    %678 = vst [vmem:[#allocation2 + $0x150] sm:$0xff] %v614
    %679 = vst [vmem:[#allocation2 + $0x158] sm:$0xff] %v615
    %680 = vst [vmem:[#allocation2 + $0x160] sm:$0xff] %v616
    %681 = vst [vmem:[#allocation2 + $0x168] sm:$0xff] %v617
    %682 = vst [vmem:[#allocation2 + $0x170] sm:$0xff] %v618
    %683 = vst [vmem:[#allocation2 + $0x178] sm:$0xff] %v619
    %684 = vst [vmem:[#allocation2 + $0x180] sm:$0xff] %v620
    %685 = vst [vmem:[#allocation2 + $0x188] sm:$0xff] %v621
    %686 = vst [vmem:[#allocation2 + $0x190] sm:$0xff] %v622
    %687 = vst [vmem:[#allocation2 + $0x198] sm:$0xff] %v623
    %688 = vst [vmem:[#allocation2 + $0x1a0] sm:$0xff] %v624
    %689 = vst [vmem:[#allocation2 + $0x1a8] sm:$0xff] %v625
    %690 = vst [vmem:[#allocation2 + $0x1b0] sm:$0xff] %v626
    %691 = vst [vmem:[#allocation2 + $0x1b8] sm:$0xff] %v627
    %692 = vst [vmem:[#allocation2 + $0x1c0] sm:$0xff] %v628
    %693 = vst [vmem:[#allocation2 + $0x1c8] sm:$0xff] %v629
    %694 = vst [vmem:[#allocation2 + $0x1d0] sm:$0xff] %v630
    %695 = vst [vmem:[#allocation2 + $0x1d8] sm:$0xff] %v631
    %696 = vst [vmem:[#allocation2 + $0x1e0] sm:$0xff] %v632
    %697 = vst [vmem:[#allocation2 + $0x1e8] sm:$0xff] %v633
    %698 = vst [vmem:[#allocation2 + $0x1f0] sm:$0xff] %v634
    %699 = vst [vmem:[#allocation2 + $0x1f8] sm:$0xff] %v635
    // Predicated region
    $region10: #{tpu_custom_call.1} parent=1 // pred_check
      _
    $region11: #{tpu_custom_call.1} parent=1 // pred_check_branch
      %701 = sbr.rel (0) target = $region13
    $region12: #{tpu_custom_call.1} parent=1 // pred_region
      %703 = vsyncadd [#allocation3], 0
      %s704 = sshll.u32 [#allocation2], 4
      %s705 = int_to_ptr.vmem [resolvable:$true] %s704
      %s706 = sshll.u32 %s2, 4
      %s707 = int_to_ptr.hbm [resolvable:$true] %s706
      %712 = dma.vmem_to_hbm [thread:$0]  %s705, 8192, %s707, [#allocation3], 256, 256, 16
    $region13: #{tpu_custom_call.1} parent=1 // pred_fallthru
      _
    // Predicated region
    $region14: #{tpu_custom_call.1} parent=1 // pred_check
      _
    $region15: #{tpu_custom_call.1} parent=1 // pred_check_branch
      %714 = sbr.rel (0) target = $region17
    $region16: #{tpu_custom_call.1} parent=1 // pred_region
      %716 = dma.done [#allocation3], 8192
    $region17: #{tpu_custom_call.1} parent=1 // pred_fallthru
      _
    %717 = vsyncpa [#allocation3], 1

// kernel: tpu_custom_call.1
$region0: #{tpu_custom_call.1}
  #allocation0 [shape = 'u32[]', space=smem, size = 0x4, offset = 0x4, fixed_abs, tag = 'smem constant byte address 0x4 - core index']
  #allocation1 [shape = 'u32[72,128]{1,0:T(1,128)}', space=vmem, size = 0x9000, scoped, tag = 'internal scratch']
  %s0 = inlined_call_operand.vmem [shape: f32[256,32], index: 0, kind: input, shape index: {}]
  %s1 = inlined_call_operand.vmem [shape: f32[32,256], index: 1, kind: input, shape index: {}]
  %s2 = inlined_call_operand.hbm [shape: f32[256,256], index: 2, kind: output, shape index: {}]
  %s3 = sld [smem:[#allocation0]]
  $region18: #{tpu_custom_call.1} parent=0
    _
  %s5 = ssub.s32 1, %s3
  %s6 = scalar_select 0, %s5, %s3
  $region1: #{tpu_custom_call.1} parent=0
    #allocation2 [shape = 'u8[262144]{0}', space=vmem, size = 0x40000, scoped, tag = 'output window, operand 0, single buffered']
    #allocation3 [shape = 's32[1]{0}', space=sflag, size = 0x4, scoped, tag = 'scoped memory for tpu_custom_call.1']
    %7 = vsyncpa [#allocation3], 0
    // Predicated region
    $region2: #{tpu_custom_call.1} parent=1 // pred_check
      _
    $region3: #{tpu_custom_call.1} parent=1 // pred_check_branch
      %9 = sbr.rel (0) target = $region5
    $region4: #{tpu_custom_call.1} parent=1 // pred_region
      _
    $region5: #{tpu_custom_call.1} parent=1 // pred_fallthru
      _
    // Predicated region
    $region6: #{tpu_custom_call.1} parent=1 // pred_check
      _
    $region7: #{tpu_custom_call.1} parent=1 // pred_check_branch
      %11 = sbr.rel (0) target = $region9
    $region8: #{tpu_custom_call.1} parent=1 // pred_region
      _
    $region9: #{tpu_custom_call.1} parent=1 // pred_fallthru
      _
    %v12 = vld [vmem:[%s0] sm:$0xff]
    %v13 = vld [vmem:[%s0 + $0x8] sm:$0xff]
    %v14 = vld [vmem:[%s0 + $0x10] sm:$0xff]
    %v15 = vld [vmem:[%s0 + $0x18] sm:$0xff]
    %v16 = vld [vmem:[%s0 + $0x20] sm:$0xff]
    %v17 = vld [vmem:[%s0 + $0x28] sm:$0xff]
    %v18 = vld [vmem:[%s0 + $0x30] sm:$0xff]
    %v19 = vld [vmem:[%s0 + $0x38] sm:$0xff]
    %v20 = vld [vmem:[%s0 + $0x40] sm:$0xff]
    %v21 = vld [vmem:[%s0 + $0x48] sm:$0xff]
    %v22 = vld [vmem:[%s0 + $0x50] sm:$0xff]
    %v23 = vld [vmem:[%s0 + $0x58] sm:$0xff]
    %v24 = vld [vmem:[%s0 + $0x60] sm:$0xff]
    %v25 = vld [vmem:[%s0 + $0x68] sm:$0xff]
    %v26 = vld [vmem:[%s0 + $0x70] sm:$0xff]
    %v27 = vld [vmem:[%s0 + $0x78] sm:$0xff]
    %v28 = vld [vmem:[%s0 + $0x80] sm:$0xff]
    %v29 = vld [vmem:[%s0 + $0x88] sm:$0xff]
    %v30 = vld [vmem:[%s0 + $0x90] sm:$0xff]
    %v31 = vld [vmem:[%s0 + $0x98] sm:$0xff]
    %v32 = vld [vmem:[%s0 + $0xa0] sm:$0xff]
    %v33 = vld [vmem:[%s0 + $0xa8] sm:$0xff]
    %v34 = vld [vmem:[%s0 + $0xb0] sm:$0xff]
    %v35 = vld [vmem:[%s0 + $0xb8] sm:$0xff]
    %v36 = vld [vmem:[%s0 + $0xc0] sm:$0xff]
    %v37 = vld [vmem:[%s0 + $0xc8] sm:$0xff]
    %v38 = vld [vmem:[%s0 + $0xd0] sm:$0xff]
    %v39 = vld [vmem:[%s0 + $0xd8] sm:$0xff]
    %v40 = vld [vmem:[%s0 + $0xe0] sm:$0xff]
    %v41 = vld [vmem:[%s0 + $0xe8] sm:$0xff]
    %v42 = vld [vmem:[%s0 + $0xf0] sm:$0xff]
    %v43 = vld [vmem:[%s0 + $0xf8] sm:$0xff]
    %v44 = vld [vmem:[%s1] sm:$0xff]
    %v45 = vld [vmem:[%s1 + $0x8] sm:$0xff]
    %v46 = vld [vmem:[%s1 + $0x10] sm:$0xff]
    %v47 = vld [vmem:[%s1 + $0x18] sm:$0xff]
    %v48 = vld [vmem:[%s1 + $0x20] sm:$0xff]
    %v49 = vld [vmem:[%s1 + $0x28] sm:$0xff]
    %v50 = vld [vmem:[%s1 + $0x30] sm:$0xff]
    %v51 = vld [vmem:[%s1 + $0x38] sm:$0xff]
    %vm52 = vcmask 261120
    %v54 = vsel %vm52, %v12, 0
    %v57 = vsel %vm52, %v13, 0
    %v60 = vsel %vm52, %v14, 0
    %v63 = vsel %vm52, %v15, 0
    %v66 = vsel %vm52, %v16, 0
    %v69 = vsel %vm52, %v17, 0
    %v72 = vsel %vm52, %v18, 0
    %v75 = vsel %vm52, %v19, 0
    %v78 = vsel %vm52, %v20, 0
    %v81 = vsel %vm52, %v21, 0
    %v84 = vsel %vm52, %v22, 0
    %v87 = vsel %vm52, %v23, 0
    %v90 = vsel %vm52, %v24, 0
    %v93 = vsel %vm52, %v25, 0
    %v96 = vsel %vm52, %v26, 0
    %v99 = vsel %vm52, %v27, 0
    %v102 = vsel %vm52, %v28, 0
    %v105 = vsel %vm52, %v29, 0
    %v108 = vsel %vm52, %v30, 0
    %v111 = vsel %vm52, %v31, 0
    %v114 = vsel %vm52, %v32, 0
    %v117 = vsel %vm52, %v33, 0
    %v120 = vsel %vm52, %v34, 0
    %v123 = vsel %vm52, %v35, 0
    %v126 = vsel %vm52, %v36, 0
    %v129 = vsel %vm52, %v37, 0
    %v132 = vsel %vm52, %v38, 0
    %v135 = vsel %vm52, %v39, 0
    %v138 = vsel %vm52, %v40, 0
    %v141 = vsel %vm52, %v41, 0
    %v144 = vsel %vm52, %v42, 0
    %v147 = vsel %vm52, %v43, 0
    %149 = vmatpush.msra.mxu0 0.0
    %150 = vmatpush.msra.mxu0 0.0
    %151 = vmatpush.msra.mxu0 0.0
    %152 = vmatpush.msra.mxu0 0.0
    %153 = vmatpush.msra.mxu0 0.0
    %154 = vmatpush.msra.mxu0 0.0
    %155 = vmatpush.msra.mxu0 0.0
    %156 = vmatpush.msra.mxu0 0.0
    %157 = vmatpush.msra.mxu0 0.0
    %158 = vmatpush.msra.mxu0 0.0
    %159 = vmatpush.msra.mxu0 0.0
    %160 = vmatpush.msra.mxu0 0.0
    %161 = vmatpush.msra.mxu0 %v50
    %162 = vmatpush.msra.mxu0 %v48
    %163 = vmatpush.msra.mxu0 %v46
    %164 = vmatpush.msra.mxu0 %v44
    %165 = vmatmul.f32.gmra.mxu0 %v54
    %v166 = vpop.f32.mrf.mxu0
    %v167 = vadd.f32 0.0, %v166
    %168 = vmatmul.f32.gmra.mxu0 %v57
    %v169 = vpop.f32.mrf.mxu0
    %v170 = vadd.f32 0.0, %v169
    %171 = vmatmul.f32.gmra.mxu0 %v60
    %v172 = vpop.f32.mrf.mxu0
    %v173 = vadd.f32 0.0, %v172
    %174 = vmatmul.f32.gmra.mxu0 %v63
    %v175 = vpop.f32.mrf.mxu0
    %v176 = vadd.f32 0.0, %v175
    %177 = vmatmul.f32.gmra.mxu0 %v66
    %v178 = vpop.f32.mrf.mxu0
    %v179 = vadd.f32 0.0, %v178
    %180 = vmatmul.f32.gmra.mxu0 %v69
    %v181 = vpop.f32.mrf.mxu0
    %v182 = vadd.f32 0.0, %v181
    %183 = vmatmul.f32.gmra.mxu0 %v72
    %v184 = vpop.f32.mrf.mxu0
    %v185 = vadd.f32 0.0, %v184
    %186 = vmatmul.f32.gmra.mxu0 %v75
    %v187 = vpop.f32.mrf.mxu0
    %v188 = vadd.f32 0.0, %v187
    %189 = vmatmul.f32.gmra.mxu0 %v78
    %v190 = vpop.f32.mrf.mxu0
    %v191 = vadd.f32 0.0, %v190
    %192 = vmatmul.f32.gmra.mxu0 %v81
    %v193 = vpop.f32.mrf.mxu0
    %v194 = vadd.f32 0.0, %v193
    %195 = vmatmul.f32.gmra.mxu0 %v84
    %v196 = vpop.f32.mrf.mxu0
    %v197 = vadd.f32 0.0, %v196
    %198 = vmatmul.f32.gmra.mxu0 %v87
    %v199 = vpop.f32.mrf.mxu0
    %v200 = vadd.f32 0.0, %v199
    %201 = vmatmul.f32.gmra.mxu0 %v90
    %v202 = vpop.f32.mrf.mxu0
    %v203 = vadd.f32 0.0, %v202
    %204 = vmatmul.f32.gmra.mxu0 %v93
    %v205 = vpop.f32.mrf.mxu0
    %v206 = vadd.f32 0.0, %v205
    %207 = vmatmul.f32.gmra.mxu0 %v96
    %v208 = vpop.f32.mrf.mxu0
    %v209 = vadd.f32 0.0, %v208
    %210 = vmatmul.f32.gmra.mxu0 %v99
    %v211 = vpop.f32.mrf.mxu0
    %v212 = vadd.f32 0.0, %v211
    %213 = vmatmul.f32.gmra.mxu0 %v102
    %v214 = vpop.f32.mrf.mxu0
    %v215 = vadd.f32 0.0, %v214
    %216 = vmatmul.f32.gmra.mxu0 %v105
    %v217 = vpop.f32.mrf.mxu0
    %v218 = vadd.f32 0.0, %v217
    %219 = vmatmul.f32.gmra.mxu0 %v108
    %v220 = vpop.f32.mrf.mxu0
    %v221 = vadd.f32 0.0, %v220
    %222 = vmatmul.f32.gmra.mxu0 %v111
    %v223 = vpop.f32.mrf.mxu0
    %v224 = vadd.f32 0.0, %v223
    %225 = vmatmul.f32.gmra.mxu0 %v114
    %v226 = vpop.f32.mrf.mxu0
    %v227 = vadd.f32 0.0, %v226
    %228 = vmatmul.f32.gmra.mxu0 %v117
    %v229 = vpop.f32.mrf.mxu0
    %v230 = vadd.f32 0.0, %v229
    %231 = vmatmul.f32.gmra.mxu0 %v120
    %v232 = vpop.f32.mrf.mxu0
    %v233 = vadd.f32 0.0, %v232
    %234 = vmatmul.f32.gmra.mxu0 %v123
    %v235 = vpop.f32.mrf.mxu0
    %v236 = vadd.f32 0.0, %v235
    %237 = vmatmul.f32.gmra.mxu0 %v126
    %v238 = vpop.f32.mrf.mxu0
    %v239 = vadd.f32 0.0, %v238
    %240 = vmatmul.f32.gmra.mxu0 %v129
    %v241 = vpop.f32.mrf.mxu0
    %v242 = vadd.f32 0.0, %v241
    %243 = vmatmul.f32.gmra.mxu0 %v132
    %v244 = vpop.f32.mrf.mxu0
    %v245 = vadd.f32 0.0, %v244
    %246 = vmatmul.f32.gmra.mxu0 %v135
    %v247 = vpop.f32.mrf.mxu0
    %v248 = vadd.f32 0.0, %v247
    %249 = vmatmul.f32.gmra.mxu0 %v138
    %v250 = vpop.f32.mrf.mxu0
    %v251 = vadd.f32 0.0, %v250
    %252 = vmatmul.f32.gmra.mxu0 %v141
    %v253 = vpop.f32.mrf.mxu0
    %v254 = vadd.f32 0.0, %v253
    %255 = vmatmul.f32.gmra.mxu0 %v144
    %v256 = vpop.f32.mrf.mxu0
    %v257 = vadd.f32 0.0, %v256
    %258 = vmatmul.f32.gmra.mxu0 %v147
    %v259 = vpop.f32.mrf.mxu0
    %v260 = vadd.f32 0.0, %v259
    %261 = vdwg.mxu0
    %262 = vmatpush.msra.mxu0 0.0
    %263 = vmatpush.msra.mxu0 0.0
    %264 = vmatpush.msra.mxu0 0.0
    %265 = vmatpush.msra.mxu0 0.0
    %266 = vmatpush.msra.mxu0 0.0
    %267 = vmatpush.msra.mxu0 0.0
    %268 = vmatpush.msra.mxu0 0.0
    %269 = vmatpush.msra.mxu0 0.0
    %270 = vmatpush.msra.mxu0 0.0
    %271 = vmatpush.msra.mxu0 0.0
    %272 = vmatpush.msra.mxu0 0.0
    %273 = vmatpush.msra.mxu0 0.0
    %274 = vmatpush.msra.mxu0 %v51
    %275 = vmatpush.msra.mxu0 %v49
    %276 = vmatpush.msra.mxu0 %v47
    %277 = vmatpush.msra.mxu0 %v45
    %278 = vmatmul.f32.gmra.mxu0 %v54
    %v279 = vpop.f32.mrf.mxu0
    %v280 = vadd.f32 0.0, %v279
    %281 = vmatmul.f32.gmra.mxu0 %v57
    %v282 = vpop.f32.mrf.mxu0
    %v283 = vadd.f32 0.0, %v282
    %284 = vmatmul.f32.gmra.mxu0 %v60
    %v285 = vpop.f32.mrf.mxu0
    %v286 = vadd.f32 0.0, %v285
    %287 = vmatmul.f32.gmra.mxu0 %v63
    %v288 = vpop.f32.mrf.mxu0
    %v289 = vadd.f32 0.0, %v288
    %290 = vmatmul.f32.gmra.mxu0 %v66
    %v291 = vpop.f32.mrf.mxu0
    %v292 = vadd.f32 0.0, %v291
    %293 = vmatmul.f32.gmra.mxu0 %v69
    %v294 = vpop.f32.mrf.mxu0
    %v295 = vadd.f32 0.0, %v294
    %296 = vmatmul.f32.gmra.mxu0 %v72
    %v297 = vpop.f32.mrf.mxu0
    %v298 = vadd.f32 0.0, %v297
    %299 = vmatmul.f32.gmra.mxu0 %v75
    %v300 = vpop.f32.mrf.mxu0
    %v301 = vadd.f32 0.0, %v300
    %302 = vmatmul.f32.gmra.mxu0 %v78
    %v303 = vpop.f32.mrf.mxu0
    %v304 = vadd.f32 0.0, %v303
    %305 = vmatmul.f32.gmra.mxu0 %v81
    %v306 = vpop.f32.mrf.mxu0
    %v307 = vadd.f32 0.0, %v306
    %308 = vmatmul.f32.gmra.mxu0 %v84
    %v309 = vpop.f32.mrf.mxu0
    %v310 = vadd.f32 0.0, %v309
    %311 = vmatmul.f32.gmra.mxu0 %v87
    %v312 = vpop.f32.mrf.mxu0
    %v313 = vadd.f32 0.0, %v312
    %314 = vmatmul.f32.gmra.mxu0 %v90
    %v315 = vpop.f32.mrf.mxu0
    %v316 = vadd.f32 0.0, %v315
    %317 = vmatmul.f32.gmra.mxu0 %v93
    %v318 = vpop.f32.mrf.mxu0
    %v319 = vadd.f32 0.0, %v318
    %320 = vmatmul.f32.gmra.mxu0 %v96
    %v321 = vpop.f32.mrf.mxu0
    %v322 = vadd.f32 0.0, %v321
    %323 = vmatmul.f32.gmra.mxu0 %v99
    %v324 = vpop.f32.mrf.mxu0
    %v325 = vadd.f32 0.0, %v324
    %326 = vmatmul.f32.gmra.mxu0 %v102
    %v327 = vpop.f32.mrf.mxu0
    %v328 = vadd.f32 0.0, %v327
    %329 = vmatmul.f32.gmra.mxu0 %v105
    %v330 = vpop.f32.mrf.mxu0
    %v331 = vadd.f32 0.0, %v330
    %332 = vmatmul.f32.gmra.mxu0 %v108
    %v333 = vpop.f32.mrf.mxu0
    %v334 = vadd.f32 0.0, %v333
    %335 = vmatmul.f32.gmra.mxu0 %v111
    %v336 = vpop.f32.mrf.mxu0
    %v337 = vadd.f32 0.0, %v336
    %338 = vmatmul.f32.gmra.mxu0 %v114
    %v339 = vpop.f32.mrf.mxu0
    %v340 = vadd.f32 0.0, %v339
    %341 = vmatmul.f32.gmra.mxu0 %v117
    %v342 = vpop.f32.mrf.mxu0
    %v343 = vadd.f32 0.0, %v342
    %344 = vmatmul.f32.gmra.mxu0 %v120
    %v345 = vpop.f32.mrf.mxu0
    %v346 = vadd.f32 0.0, %v345
    %347 = vmatmul.f32.gmra.mxu0 %v123
    %v348 = vpop.f32.mrf.mxu0
    %v349 = vadd.f32 0.0, %v348
    %350 = vmatmul.f32.gmra.mxu0 %v126
    %v351 = vpop.f32.mrf.mxu0
    %v352 = vadd.f32 0.0, %v351
    %353 = vmatmul.f32.gmra.mxu0 %v129
    %v354 = vpop.f32.mrf.mxu0
    %v355 = vadd.f32 0.0, %v354
    %356 = vmatmul.f32.gmra.mxu0 %v132
    %v357 = vpop.f32.mrf.mxu0
    %v358 = vadd.f32 0.0, %v357
    %359 = vmatmul.f32.gmra.mxu0 %v135
    %v360 = vpop.f32.mrf.mxu0
    %v361 = vadd.f32 0.0, %v360
    %362 = vmatmul.f32.gmra.mxu0 %v138
    %v363 = vpop.f32.mrf.mxu0
    %v364 = vadd.f32 0.0, %v363
    %365 = vmatmul.f32.gmra.mxu0 %v141
    %v366 = vpop.f32.mrf.mxu0
    %v367 = vadd.f32 0.0, %v366
    %368 = vmatmul.f32.gmra.mxu0 %v144
    %v369 = vpop.f32.mrf.mxu0
    %v370 = vadd.f32 0.0, %v369
    %371 = vmatmul.f32.gmra.mxu0 %v147
    %v372 = vpop.f32.mrf.mxu0
    %v373 = vadd.f32 0.0, %v372
    %374 = vdwg.mxu0
    %v375 = vmul.f32 %v167, 0.5
    %v376 = vmul.f32 %v280, 0.5
    %v377 = vmul.f32 %v170, 0.5
    %v378 = vmul.f32 %v283, 0.5
    %v379 = vmul.f32 %v173, 0.5
    %v380 = vmul.f32 %v286, 0.5
    %v381 = vmul.f32 %v176, 0.5
    %v382 = vmul.f32 %v289, 0.5
    %v383 = vmul.f32 %v179, 0.5
    %v384 = vmul.f32 %v292, 0.5
    %v385 = vmul.f32 %v182, 0.5
    %v386 = vmul.f32 %v295, 0.5
    %v387 = vmul.f32 %v185, 0.5
    %v388 = vmul.f32 %v298, 0.5
    %v389 = vmul.f32 %v188, 0.5
    %v390 = vmul.f32 %v301, 0.5
    %v391 = vmul.f32 %v191, 0.5
    %v392 = vmul.f32 %v304, 0.5
    %v393 = vmul.f32 %v194, 0.5
    %v394 = vmul.f32 %v307, 0.5
    %v395 = vmul.f32 %v197, 0.5
    %v396 = vmul.f32 %v310, 0.5
    %v397 = vmul.f32 %v200, 0.5
    %v398 = vmul.f32 %v313, 0.5
    %v399 = vmul.f32 %v203, 0.5
    %v400 = vmul.f32 %v316, 0.5
    %v401 = vmul.f32 %v206, 0.5
    %v402 = vmul.f32 %v319, 0.5
    %v403 = vmul.f32 %v209, 0.5
    %v404 = vmul.f32 %v322, 0.5
    %v405 = vmul.f32 %v212, 0.5
    %v406 = vmul.f32 %v325, 0.5
    %v407 = vmul.f32 %v215, 0.5
    %v408 = vmul.f32 %v328, 0.5
    %v409 = vmul.f32 %v218, 0.5
    %v410 = vmul.f32 %v331, 0.5
    %v411 = vmul.f32 %v221, 0.5
    %v412 = vmul.f32 %v334, 0.5
    %v413 = vmul.f32 %v224, 0.5
    %v414 = vmul.f32 %v337, 0.5
    %v415 = vmul.f32 %v227, 0.5
    %v416 = vmul.f32 %v340, 0.5
    %v417 = vmul.f32 %v230, 0.5
    %v418 = vmul.f32 %v343, 0.5
    %v419 = vmul.f32 %v233, 0.5
    %v420 = vmul.f32 %v346, 0.5
    %v421 = vmul.f32 %v236, 0.5
    %v422 = vmul.f32 %v349, 0.5
    %v423 = vmul.f32 %v239, 0.5
    %v424 = vmul.f32 %v352, 0.5
    %v425 = vmul.f32 %v242, 0.5
    %v426 = vmul.f32 %v355, 0.5
    %v427 = vmul.f32 %v245, 0.5
    %v428 = vmul.f32 %v358, 0.5
    %v429 = vmul.f32 %v248, 0.5
    %v430 = vmul.f32 %v361, 0.5
    %v431 = vmul.f32 %v251, 0.5
    %v432 = vmul.f32 %v364, 0.5
    %v433 = vmul.f32 %v254, 0.5
    %v434 = vmul.f32 %v367, 0.5
    %v435 = vmul.f32 %v257, 0.5
    %v436 = vmul.f32 %v370, 0.5
    %v437 = vmul.f32 %v260, 0.5
    %v438 = vmul.f32 %v373, 0.5
    %v439 = vtanh.pop %v375
    %v440 = vtanh.pop %v376
    %v441 = vtanh.pop %v377
    %v442 = vtanh.pop %v378
    %v443 = vtanh.pop %v379
    %v444 = vtanh.pop %v380
    %v445 = vtanh.pop %v381
    %v446 = vtanh.pop %v382
    %v447 = vtanh.pop %v383
    %v448 = vtanh.pop %v384
    %v449 = vtanh.pop %v385
    %v450 = vtanh.pop %v386
    %v451 = vtanh.pop %v387
    %v452 = vtanh.pop %v388
    %v453 = vtanh.pop %v389
    %v454 = vtanh.pop %v390
    %v455 = vtanh.pop %v391
    %v456 = vtanh.pop %v392
    %v457 = vtanh.pop %v393
    %v458 = vtanh.pop %v394
    %v459 = vtanh.pop %v395
    %v460 = vtanh.pop %v396
    %v461 = vtanh.pop %v397
    %v462 = vtanh.pop %v398
    %v463 = vtanh.pop %v399
    %v464 = vtanh.pop %v400
    %v465 = vtanh.pop %v401
    %v466 = vtanh.pop %v402
    %v467 = vtanh.pop %v403
    %v468 = vtanh.pop %v404
    %v469 = vtanh.pop %v405
    %v470 = vtanh.pop %v406
    %v471 = vtanh.pop %v407
    %v472 = vtanh.pop %v408
    %v473 = vtanh.pop %v409
    %v474 = vtanh.pop %v410
    %v475 = vtanh.pop %v411
    %v476 = vtanh.pop %v412
    %v477 = vtanh.pop %v413
    %v478 = vtanh.pop %v414
    %v479 = vtanh.pop %v415
    %v480 = vtanh.pop %v416
    %v481 = vtanh.pop %v417
    %v482 = vtanh.pop %v418
    %v483 = vtanh.pop %v419
    %v484 = vtanh.pop %v420
    %v485 = vtanh.pop %v421
    %v486 = vtanh.pop %v422
    %v487 = vtanh.pop %v423
    %v488 = vtanh.pop %v424
    %v489 = vtanh.pop %v425
    %v490 = vtanh.pop %v426
    %v491 = vtanh.pop %v427
    %v492 = vtanh.pop %v428
    %v493 = vtanh.pop %v429
    %v494 = vtanh.pop %v430
    %v495 = vtanh.pop %v431
    %v496 = vtanh.pop %v432
    %v497 = vtanh.pop %v433
    %v498 = vtanh.pop %v434
    %v499 = vtanh.pop %v435
    %v500 = vtanh.pop %v436
    %v501 = vtanh.pop %v437
    %v502 = vtanh.pop %v438
    %v503 = vadd.f32 %v439, 1.0
    %v504 = vadd.f32 %v440, 1.0
    %v505 = vadd.f32 %v441, 1.0
    %v506 = vadd.f32 %v442, 1.0
    %v507 = vadd.f32 %v443, 1.0
    %v508 = vadd.f32 %v444, 1.0
    %v509 = vadd.f32 %v445, 1.0
    %v510 = vadd.f32 %v446, 1.0
    %v511 = vadd.f32 %v447, 1.0
    %v512 = vadd.f32 %v448, 1.0
    %v513 = vadd.f32 %v449, 1.0
    %v514 = vadd.f32 %v450, 1.0
    %v515 = vadd.f32 %v451, 1.0
    %v516 = vadd.f32 %v452, 1.0
    %v517 = vadd.f32 %v453, 1.0
    %v518 = vadd.f32 %v454, 1.0
    %v519 = vadd.f32 %v455, 1.0
    %v520 = vadd.f32 %v456, 1.0
    %v521 = vadd.f32 %v457, 1.0
    %v522 = vadd.f32 %v458, 1.0
    %v523 = vadd.f32 %v459, 1.0
    %v524 = vadd.f32 %v460, 1.0
    %v525 = vadd.f32 %v461, 1.0
    %v526 = vadd.f32 %v462, 1.0
    %v527 = vadd.f32 %v463, 1.0
    %v528 = vadd.f32 %v464, 1.0
    %v529 = vadd.f32 %v465, 1.0
    %v530 = vadd.f32 %v466, 1.0
    %v531 = vadd.f32 %v467, 1.0
    %v532 = vadd.f32 %v468, 1.0
    %v533 = vadd.f32 %v469, 1.0
    %v534 = vadd.f32 %v470, 1.0
    %v535 = vadd.f32 %v471, 1.0
    %v536 = vadd.f32 %v472, 1.0
    %v537 = vadd.f32 %v473, 1.0
    %v538 = vadd.f32 %v474, 1.0
    %v539 = vadd.f32 %v475, 1.0
    %v540 = vadd.f32 %v476, 1.0
    %v541 = vadd.f32 %v477, 1.0
    %v542 = vadd.f32 %v478, 1.0
    %v543 = vadd.f32 %v479, 1.0
    %v544 = vadd.f32 %v480, 1.0
    %v545 = vadd.f32 %v481, 1.0
    %v546 = vadd.f32 %v482, 1.0
    %v547 = vadd.f32 %v483, 1.0
    %v548 = vadd.f32 %v484, 1.0
    %v549 = vadd.f32 %v485, 1.0
    %v550 = vadd.f32 %v486, 1.0
    %v551 = vadd.f32 %v487, 1.0
    %v552 = vadd.f32 %v488, 1.0
    %v553 = vadd.f32 %v489, 1.0
    %v554 = vadd.f32 %v490, 1.0
    %v555 = vadd.f32 %v491, 1.0
    %v556 = vadd.f32 %v492, 1.0
    %v557 = vadd.f32 %v493, 1.0
    %v558 = vadd.f32 %v494, 1.0
    %v559 = vadd.f32 %v495, 1.0
    %v560 = vadd.f32 %v496, 1.0
    %v561 = vadd.f32 %v497, 1.0
    %v562 = vadd.f32 %v498, 1.0
    %v563 = vadd.f32 %v499, 1.0
    %v564 = vadd.f32 %v500, 1.0
    %v565 = vadd.f32 %v501, 1.0
    %v566 = vadd.f32 %v502, 1.0
    %v567 = vmul.f32 %v503, 0.5
    %v568 = vmul.f32 %v504, 0.5
    %v569 = vmul.f32 %v505, 0.5
    %v570 = vmul.f32 %v506, 0.5
    %v571 = vmul.f32 %v507, 0.5
    %v572 = vmul.f32 %v508, 0.5
    %v573 = vmul.f32 %v509, 0.5
    %v574 = vmul.f32 %v510, 0.5
    %v575 = vmul.f32 %v511, 0.5
    %v576 = vmul.f32 %v512, 0.5
    %v577 = vmul.f32 %v513, 0.5
    %v578 = vmul.f32 %v514, 0.5
    %v579 = vmul.f32 %v515, 0.5
    %v580 = vmul.f32 %v516, 0.5
    %v581 = vmul.f32 %v517, 0.5
    %v582 = vmul.f32 %v518, 0.5
    %v583 = vmul.f32 %v519, 0.5
    %v584 = vmul.f32 %v520, 0.5
    %v585 = vmul.f32 %v521, 0.5
    %v586 = vmul.f32 %v522, 0.5
    %v587 = vmul.f32 %v523, 0.5
    %v588 = vmul.f32 %v524, 0.5
    %v589 = vmul.f32 %v525, 0.5
    %v590 = vmul.f32 %v526, 0.5
    %v591 = vmul.f32 %v527, 0.5
    %v592 = vmul.f32 %v528, 0.5
    %v593 = vmul.f32 %v529, 0.5
    %v594 = vmul.f32 %v530, 0.5
    %v595 = vmul.f32 %v531, 0.5
    %v596 = vmul.f32 %v532, 0.5
    %v597 = vmul.f32 %v533, 0.5
    %v598 = vmul.f32 %v534, 0.5
    %v599 = vmul.f32 %v535, 0.5
    %v600 = vmul.f32 %v536, 0.5
    %v601 = vmul.f32 %v537, 0.5
    %v602 = vmul.f32 %v538, 0.5
    %v603 = vmul.f32 %v539, 0.5
    %v604 = vmul.f32 %v540, 0.5
    %v605 = vmul.f32 %v541, 0.5
    %v606 = vmul.f32 %v542, 0.5
    %v607 = vmul.f32 %v543, 0.5
    %v608 = vmul.f32 %v544, 0.5
    %v609 = vmul.f32 %v545, 0.5
    %v610 = vmul.f32 %v546, 0.5
    %v611 = vmul.f32 %v547, 0.5
    %v612 = vmul.f32 %v548, 0.5
    %v613 = vmul.f32 %v549, 0.5
    %v614 = vmul.f32 %v550, 0.5
    %v615 = vmul.f32 %v551, 0.5
    %v616 = vmul.f32 %v552, 0.5
    %v617 = vmul.f32 %v553, 0.5
    %v618 = vmul.f32 %v554, 0.5
    %v619 = vmul.f32 %v555, 0.5
    %v620 = vmul.f32 %v556, 0.5
    %v621 = vmul.f32 %v557, 0.5
    %v622 = vmul.f32 %v558, 0.5
    %v623 = vmul.f32 %v559, 0.5
    %v624 = vmul.f32 %v560, 0.5
    %v625 = vmul.f32 %v561, 0.5
    %v626 = vmul.f32 %v562, 0.5
    %v627 = vmul.f32 %v563, 0.5
    %v628 = vmul.f32 %v564, 0.5
    %v629 = vmul.f32 %v565, 0.5
    %v630 = vmul.f32 %v566, 0.5
    %631 = vst [vmem:[#allocation2] sm:$0xff] %v567
    %632 = vst [vmem:[#allocation2 + $0x8] sm:$0xff] %v568
    %633 = vst [vmem:[#allocation2 + $0x10] sm:$0xff] %v569
    %634 = vst [vmem:[#allocation2 + $0x18] sm:$0xff] %v570
    %635 = vst [vmem:[#allocation2 + $0x20] sm:$0xff] %v571
    %636 = vst [vmem:[#allocation2 + $0x28] sm:$0xff] %v572
    %637 = vst [vmem:[#allocation2 + $0x30] sm:$0xff] %v573
    %638 = vst [vmem:[#allocation2 + $0x38] sm:$0xff] %v574
    %639 = vst [vmem:[#allocation2 + $0x40] sm:$0xff] %v575
    %640 = vst [vmem:[#allocation2 + $0x48] sm:$0xff] %v576
    %641 = vst [vmem:[#allocation2 + $0x50] sm:$0xff] %v577
    %642 = vst [vmem:[#allocation2 + $0x58] sm:$0xff] %v578
    %643 = vst [vmem:[#allocation2 + $0x60] sm:$0xff] %v579
    %644 = vst [vmem:[#allocation2 + $0x68] sm:$0xff] %v580
    %645 = vst [vmem:[#allocation2 + $0x70] sm:$0xff] %v581
    %646 = vst [vmem:[#allocation2 + $0x78] sm:$0xff] %v582
    %647 = vst [vmem:[#allocation2 + $0x80] sm:$0xff] %v583
    %648 = vst [vmem:[#allocation2 + $0x88] sm:$0xff] %v584
    %649 = vst [vmem:[#allocation2 + $0x90] sm:$0xff] %v585
    %650 = vst [vmem:[#allocation2 + $0x98] sm:$0xff] %v586
    %651 = vst [vmem:[#allocation2 + $0xa0] sm:$0xff] %v587
    %652 = vst [vmem:[#allocation2 + $0xa8] sm:$0xff] %v588
    %653 = vst [vmem:[#allocation2 + $0xb0] sm:$0xff] %v589
    %654 = vst [vmem:[#allocation2 + $0xb8] sm:$0xff] %v590
    %655 = vst [vmem:[#allocation2 + $0xc0] sm:$0xff] %v591
    %656 = vst [vmem:[#allocation2 + $0xc8] sm:$0xff] %v592
    %657 = vst [vmem:[#allocation2 + $0xd0] sm:$0xff] %v593
    %658 = vst [vmem:[#allocation2 + $0xd8] sm:$0xff] %v594
    %659 = vst [vmem:[#allocation2 + $0xe0] sm:$0xff] %v595
    %660 = vst [vmem:[#allocation2 + $0xe8] sm:$0xff] %v596
    %661 = vst [vmem:[#allocation2 + $0xf0] sm:$0xff] %v597
    %662 = vst [vmem:[#allocation2 + $0xf8] sm:$0xff] %v598
    %663 = vst [vmem:[#allocation2 + $0x100] sm:$0xff] %v599
    %664 = vst [vmem:[#allocation2 + $0x108] sm:$0xff] %v600
    %665 = vst [vmem:[#allocation2 + $0x110] sm:$0xff] %v601
    %666 = vst [vmem:[#allocation2 + $0x118] sm:$0xff] %v602
    %667 = vst [vmem:[#allocation2 + $0x120] sm:$0xff] %v603
    %668 = vst [vmem:[#allocation2 + $0x128] sm:$0xff] %v604
    %669 = vst [vmem:[#allocation2 + $0x130] sm:$0xff] %v605
    %670 = vst [vmem:[#allocation2 + $0x138] sm:$0xff] %v606
    %671 = vst [vmem:[#allocation2 + $0x140] sm:$0xff] %v607
    %672 = vst [vmem:[#allocation2 + $0x148] sm:$0xff] %v608
    %673 = vst [vmem:[#allocation2 + $0x150] sm:$0xff] %v609
    %674 = vst [vmem:[#allocation2 + $0x158] sm:$0xff] %v610
    %675 = vst [vmem:[#allocation2 + $0x160] sm:$0xff] %v611
    %676 = vst [vmem:[#allocation2 + $0x168] sm:$0xff] %v612
    %677 = vst [vmem:[#allocation2 + $0x170] sm:$0xff] %v613
    %678 = vst [vmem:[#allocation2 + $0x178] sm:$0xff] %v614
    %679 = vst [vmem:[#allocation2 + $0x180] sm:$0xff] %v615
    %680 = vst [vmem:[#allocation2 + $0x188] sm:$0xff] %v616
    %681 = vst [vmem:[#allocation2 + $0x190] sm:$0xff] %v617
    %682 = vst [vmem:[#allocation2 + $0x198] sm:$0xff] %v618
    %683 = vst [vmem:[#allocation2 + $0x1a0] sm:$0xff] %v619
    %684 = vst [vmem:[#allocation2 + $0x1a8] sm:$0xff] %v620
    %685 = vst [vmem:[#allocation2 + $0x1b0] sm:$0xff] %v621
    %686 = vst [vmem:[#allocation2 + $0x1b8] sm:$0xff] %v622
    %687 = vst [vmem:[#allocation2 + $0x1c0] sm:$0xff] %v623
    %688 = vst [vmem:[#allocation2 + $0x1c8] sm:$0xff] %v624
    %689 = vst [vmem:[#allocation2 + $0x1d0] sm:$0xff] %v625
    %690 = vst [vmem:[#allocation2 + $0x1d8] sm:$0xff] %v626
    %691 = vst [vmem:[#allocation2 + $0x1e0] sm:$0xff] %v627
    %692 = vst [vmem:[#allocation2 + $0x1e8] sm:$0xff] %v628
    %693 = vst [vmem:[#allocation2 + $0x1f0] sm:$0xff] %v629
    %694 = vst [vmem:[#allocation2 + $0x1f8] sm:$0xff] %v630
    // Predicated region
    $region10: #{tpu_custom_call.1} parent=1 // pred_check
      _
    $region11: #{tpu_custom_call.1} parent=1 // pred_check_branch
      %696 = sbr.rel (0) target = $region13
    $region12: #{tpu_custom_call.1} parent=1 // pred_region
      %698 = vsyncadd [#allocation3], 0
      %s699 = sshll.u32 [#allocation2], 4
      %s700 = int_to_ptr.vmem [resolvable:$true] %s699
      %s701 = sshll.u32 %s2, 4
      %s702 = int_to_ptr.hbm [resolvable:$true] %s701
      %707 = dma.vmem_to_hbm [thread:$0]  %s700, 8192, %s702, [#allocation3], 256, 256, 16
    $region13: #{tpu_custom_call.1} parent=1 // pred_fallthru
      _
    // Predicated region
    $region14: #{tpu_custom_call.1} parent=1 // pred_check
      _
    $region15: #{tpu_custom_call.1} parent=1 // pred_check_branch
      %709 = sbr.rel (0) target = $region17
    $region16: #{tpu_custom_call.1} parent=1 // pred_region
      %711 = dma.done [#allocation3], 8192
    $region17: #{tpu_custom_call.1} parent=1 // pred_fallthru
      _
    %712 = vsyncpa [#allocation3], 1

</llo_original>
